<compile_context>
chip_gen: v5e
topology: v5e:2x2
jax: 0.10.0
libtpu: 0.0.40
codegen_flags: <defaults>
</compile_context>

<pallas_src>
import functools

import jax
import jax.numpy as jnp
import numpy as np
from jax.experimental import pallas as pl
from jax.experimental.pallas import tpu as pltpu

NUM_HEADS = 8


def _head_kernel(idx_ref,                 # SMEM (3*B,) int32 scalar-prefetch
                 enc_ref,                 # VMEM (1, S, E) bf16
                 wq_ref, wk_ref, wv_ref,  # VMEM (E, E) bf16 (wq pre-transposed + pre-scaled)
                 bq_ref,                  # VMEM (1, E) f32 (pre-scaled)
                 bk_ref, bv_ref,          # VMEM (E, 1) f32
                 wf_ref, bf_ref,          # VMEM (E, C) f32, (1, C) f32  (Wo@Wfc fused)
                 out_ref,                 # VMEM (1, 2, C) f32
                 *, num_heads):
    i = pl.program_id(0)
    _, S, E = enc_ref.shape
    H = num_heads
    Dh = E // H
    C = out_ref.shape[2]

    # segment boundaries for this batch element (dynamic scalars from SMEM)
    sq = idx_ref[3 * i]        # question start
    eq = idx_ref[3 * i + 1]    # question end == pseudo-answer start
    ea = idx_ref[3 * i + 2]    # pseudo-answer end == context start

    x = enc_ref[0]                                                   # (S, E) bf16

    # Q in (S, E); K, V in transposed (E, S) layout so per-head slicing is a
    # sublane slice.  Scale 1/sqrt(Dh) is folded into wq/bq on the host.
    q = jnp.dot(x, wq_ref[...],
                preferred_element_type=jnp.float32) + bq_ref[...]    # (S, E) f32
    kT = jax.lax.dot_general(wk_ref[...], x, (((1,), (1,)), ((), ())),
                             preferred_element_type=jnp.float32) + bk_ref[...]  # (E, S)
    vT = jax.lax.dot_general(wv_ref[...], x, (((1,), (1,)), ((), ())),
                             preferred_element_type=jnp.float32) + bv_ref[...]  # (E, S)

    kpos = jax.lax.broadcasted_iota(jnp.int32, (1, S), 1)            # key / query cols
    q_cnt = jnp.maximum((eq - sq).astype(jnp.float32), 1.0)
    # pooling row: 1/q_cnt on question positions, 0 elsewhere (AdaptiveAvgPool1d(1))
    qpool = jnp.where((kpos >= sq) & (kpos < eq), 1.0 / q_cnt, 0.0)  # (1, S) f32
    pa_mask = (kpos >= eq) & (kpos < ea)                             # (1, S)
    ctx_mask = kpos >= ea                                            # (1, S)
    neg = jnp.float32(-1e30)

    def pooled_attn_row(s, key_mask):
        # masked softmax over keys, then pool over question rows -> (1, S)
        sm = jnp.where(key_mask, s, neg)
        m = jnp.max(sm, axis=-1, keepdims=True)
        p = jnp.exp(sm - m)
        r = jnp.sum(p, axis=-1, keepdims=True)
        attn = p * pl.reciprocal(r, approx=True)
        return jnp.dot(qpool, attn, preferred_element_type=jnp.float32)

    acc = jnp.zeros((2, C), jnp.float32)
    for h in range(H):                       # static unroll over heads
        lo = h * Dh
        qh = q[:, lo:lo + Dh]                # (S, Dh)
        kTh = kT[lo:lo + Dh, :]              # (Dh, S) sublane slice
        vTh = vT[lo:lo + Dh, :]              # (Dh, S) sublane slice
        # shared scores for both segments (scale already folded into q)
        s = jnp.dot(qh, kTh, preferred_element_type=jnp.float32)     # (S, S)
        rows = jnp.concatenate([pooled_attn_row(s, pa_mask),
                                pooled_attn_row(s, ctx_mask)], axis=0)  # (2, S)
        # pooled attention @ V^T  -> pooled per-head output (2, Dh)
        oh = jax.lax.dot_general(rows, vTh, (((1,), (1,)), ((), ())),
                                 preferred_element_type=jnp.float32)
        # fused (Wo @ Wfc) per-head block -> accumulate class logits
        acc = acc + jnp.dot(oh, wf_ref[lo:lo + Dh, :],
                            preferred_element_type=jnp.float32)      # (2, C)

    out_ref[0] = acc + bf_ref[...]                                   # (2, C)


def classification_head(enc, idx, wqkv, bqkv, wo, bo, wfc, bfc, *, num_heads=NUM_HEADS):
    """enc: (B,S,E) f32, idx: (B,3) i32, weights in PyTorch orientation."""
    B, S, E = enc.shape
    C = wfc.shape[0]
    Dh = E // num_heads
    scale = 1.0 / np.sqrt(Dh)

    # host-side prep: split in_proj, fold softmax scale into Wq/bq, fold
    # Wo->pool->Wfc into one (E,C) matmul + (1,C) bias, cast matmul weights
    # (and activations) to bf16; accumulation stays f32 in-kernel.
    wq_t = (jnp.transpose(wqkv[:E]) * scale).astype(jnp.bfloat16)    # (E, E)
    wk_b = wqkv[E:2 * E].astype(jnp.bfloat16)                        # (E, E) PyTorch orient.
    wv_b = wqkv[2 * E:].astype(jnp.bfloat16)                         # (E, E)
    bq = (bqkv[:E] * scale).reshape(1, E).astype(jnp.float32)
    bk_c = bqkv[E:2 * E].reshape(E, 1).astype(jnp.float32)
    bv_c = bqkv[2 * E:].reshape(E, 1).astype(jnp.float32)
    wf = (jnp.transpose(wo) @ jnp.transpose(wfc)).astype(jnp.float32)        # (E, C)
    bf = (bo @ jnp.transpose(wfc) + bfc).reshape(1, C).astype(jnp.float32)   # (1, C)
    enc_bf = enc.astype(jnp.bfloat16)
    idx_flat = idx.reshape(-1).astype(jnp.int32)                     # (3*B,) 1-D SMEM

    full2 = lambda i, idx_ref: (0, 0)
    out = pl.pallas_call(
        functools.partial(_head_kernel, num_heads=num_heads),
        out_shape=jax.ShapeDtypeStruct((B, 2, C), jnp.float32),
        grid_spec=pltpu.PrefetchScalarGridSpec(
            num_scalar_prefetch=1,
            grid=(B,),
            in_specs=[
                pl.BlockSpec((1, S, E), lambda i, idx_ref: (i, 0, 0)),
                pl.BlockSpec((E, E), full2),   # wq (transposed, scaled)
                pl.BlockSpec((E, E), full2),   # wk
                pl.BlockSpec((E, E), full2),   # wv
                pl.BlockSpec((1, E), full2),   # bq (scaled)
                pl.BlockSpec((E, 1), full2),   # bk (column)
                pl.BlockSpec((E, 1), full2),   # bv (column)
                pl.BlockSpec((E, C), full2),   # fused Wo@Wfc
                pl.BlockSpec((1, C), full2),   # fused bias
            ],
            out_specs=pl.BlockSpec((1, 2, C), lambda i, idx_ref: (i, 0, 0)),
        ),
        # batch grid axis is fully independent -> shard across v7x's 2 TCs
        compiler_params=pltpu.CompilerParams(dimension_semantics=("parallel",)),
    )(idx_flat, enc_bf, wq_t, wk_b, wv_b, bq, bk_c, bv_c, wf, bf)
    return out.reshape(B * 2, C)


def reference_head(enc, idx, wqkv, bqkv, wo, bo, wfc, bfc, *, num_heads=NUM_HEADS):
    """Pure-JAX (f32) mirror of the PyTorch forward (slicing version)."""
    B, S, E = enc.shape
    H, Dh = num_heads, E // num_heads
    outs = []
    for i in range(B):
        sq, eq, ea = int(idx[i, 0]), int(idx[i, 1]), int(idx[i, 2])
        qf = enc[i, sq:eq]
        segs = [enc[i, eq:ea], enc[i, ea:]]
        for kv in segs:
            qp = qf @ wqkv[:E].T + bqkv[:E]
            kp = kv @ wqkv[E:2 * E].T + bqkv[E:2 * E]
            vp = kv @ wqkv[2 * E:].T + bqkv[2 * E:]
            qh = qp.reshape(-1, H, Dh).transpose(1, 0, 2)
            kh = kp.reshape(-1, H, Dh).transpose(1, 0, 2)
            vh = vp.reshape(-1, H, Dh).transpose(1, 0, 2)
            s = jnp.einsum('hqd,hkd->hqk', qh, kh) / np.sqrt(Dh)
            a = jax.nn.softmax(s, axis=-1)
            o = jnp.einsum('hqk,hkd->hqd', a, vh).transpose(1, 0, 2).reshape(-1, E)
            o = o @ wo.T + bo
            pooled = o.mean(axis=0)
            outs.append(pooled @ wfc.T + bfc)
    return jnp.stack(outs)


if __name__ == "__main__":
    B, S, E, C = 2, 16, 64, 4          # batch, seq, embed_dim, num_classes

    key = jax.random.PRNGKey(0)
    k_enc, k_w1, k_b1, k_w2, k_b2, k_w3, k_b3 = jax.random.split(key, 7)

    # synthesized encoder_last_hidden_state (stand-in for the FLAN-T5 encoder)
    enc = jax.random.normal(k_enc, (B, S, E), dtype=jnp.float32)
    # input_indices_list: [question_start, question_end, pseudo_answer_end]
    idx = jnp.array([[0, 5, 10], [1, 6, 9]], dtype=jnp.int32)

    # nn.MultiheadAttention(embed_dim=E, num_heads=8) parameters
    wqkv = 0.1 * jax.random.normal(k_w1, (3 * E, E), dtype=jnp.float32)  # in_proj_weight
    bqkv = 0.1 * jax.random.normal(k_b1, (3 * E,), dtype=jnp.float32)    # in_proj_bias
    wo = 0.1 * jax.random.normal(k_w2, (E, E), dtype=jnp.float32)        # out_proj.weight
    bo = 0.1 * jax.random.normal(k_b2, (E,), dtype=jnp.float32)          # out_proj.bias
    # nn.Linear(embed_dim, num_classes)
    wfc = 0.1 * jax.random.normal(k_w3, (C, E), dtype=jnp.float32)
    bfc = 0.1 * jax.random.normal(k_b3, (C,), dtype=jnp.float32)

    class_logit = classification_head(enc, idx, wqkv, bqkv, wo, bo, wfc, bfc)
    class_logit = jax.block_until_ready(class_logit)

    ref = reference_head(np.asarray(enc), np.asarray(idx), wqkv, bqkv, wo, bo, wfc, bfc)
    np.testing.assert_allclose(np.asarray(class_logit), np.asarray(ref),
                               rtol=2e-2, atol=2e-2)

    assert class_logit.shape == (2 * B, C)
    print("KERNEL_OK")
</pallas_src>

<mosaic_0001>
module attributes {stable_mosaic.version = 11 : i64} {
  func.func @_head_kernel(%arg0: i32, %arg1: memref<6xi32, #tpu.memory_space<smem>>, %arg2: memref<1x16x64xbf16, #tpu.memory_space<vmem>>, %arg3: memref<64x64xbf16, #tpu.memory_space<vmem>>, %arg4: memref<64x64xbf16, #tpu.memory_space<vmem>>, %arg5: memref<64x64xbf16, #tpu.memory_space<vmem>>, %arg6: memref<1x64xf32, #tpu.memory_space<vmem>>, %arg7: memref<64x1xf32, #tpu.memory_space<vmem>>, %arg8: memref<64x1xf32, #tpu.memory_space<vmem>>, %arg9: memref<64x4xf32, #tpu.memory_space<vmem>>, %arg10: memref<1x4xf32, #tpu.memory_space<vmem>>, %arg11: memref<1x2x4xf32, #tpu.memory_space<vmem>>) attributes {dimension_semantics = [#tpu.dimension_semantics<parallel>], iteration_bounds = array<i64: 2>, scalar_prefetch = 1 : i64, scratch_operands = 0 : i64, tpu.core_type = #tpu.core_type<tc>, window_params = [{transform_indices = @transform_0, window_bounds = array<i64: 1, 16, 64>}, {pipeline_mode = #tpu.pipeline_mode<synchronous>, transform_indices = @transform_1, window_bounds = array<i64: 64, 64>}, {pipeline_mode = #tpu.pipeline_mode<synchronous>, transform_indices = @transform_2, window_bounds = array<i64: 64, 64>}, {pipeline_mode = #tpu.pipeline_mode<synchronous>, transform_indices = @transform_3, window_bounds = array<i64: 64, 64>}, {pipeline_mode = #tpu.pipeline_mode<synchronous>, transform_indices = @transform_4, window_bounds = array<i64: 1, 64>}, {pipeline_mode = #tpu.pipeline_mode<synchronous>, transform_indices = @transform_5, window_bounds = array<i64: 64, 1>}, {pipeline_mode = #tpu.pipeline_mode<synchronous>, transform_indices = @transform_6, window_bounds = array<i64: 64, 1>}, {pipeline_mode = #tpu.pipeline_mode<synchronous>, transform_indices = @transform_7, window_bounds = array<i64: 64, 4>}, {pipeline_mode = #tpu.pipeline_mode<synchronous>, transform_indices = @transform_8, window_bounds = array<i64: 1, 4>}, {transform_indices = @transform_9, window_bounds = array<i64: 1, 2, 4>}]} {
    %c3_i32 = arith.constant 3 : i32
    %0 = arith.muli %c3_i32, %arg0 : i32
    %1 = arith.index_cast %0 : i32 to index
    %2 = memref.load %arg1[%1] : memref<6xi32, #tpu.memory_space<smem>>
    %c3_i32_0 = arith.constant 3 : i32
    %3 = arith.muli %c3_i32_0, %arg0 : i32
    %c1_i32 = arith.constant 1 : i32
    %4 = arith.addi %3, %c1_i32 : i32
    %5 = arith.index_cast %4 : i32 to index
    %6 = memref.load %arg1[%5] : memref<6xi32, #tpu.memory_space<smem>>
    %c3_i32_1 = arith.constant 3 : i32
    %7 = arith.muli %c3_i32_1, %arg0 : i32
    %c2_i32 = arith.constant 2 : i32
    %8 = arith.addi %7, %c2_i32 : i32
    %9 = arith.index_cast %8 : i32 to index
    %10 = memref.load %arg1[%9] : memref<6xi32, #tpu.memory_space<smem>>
    %c0 = arith.constant 0 : index
    %c0_2 = arith.constant 0 : index
    %c0_3 = arith.constant 0 : index
    %11 = vector.load %arg2[%c0, %c0_2, %c0_3] : memref<1x16x64xbf16, #tpu.memory_space<vmem>>, vector<1x16x64xbf16>
    %12 = vector.shape_cast %11 : vector<1x16x64xbf16> to vector<16x64xbf16>
    %c0_4 = arith.constant 0 : index
    %c0_5 = arith.constant 0 : index
    %13 = vector.load %arg3[%c0_4, %c0_5] : memref<64x64xbf16, #tpu.memory_space<vmem>>, vector<64x64xbf16>
    %cst = arith.constant dense<0.000000e+00> : vector<16x64xf32>
    %14 = tpu.matmul %12, %13, %cst {dimension_numbers = #tpu.dot_dimension_numbers<[1], [0], [0], [1], [0, 0, 1, 1], [], []>} : vector<16x64xbf16>, vector<64x64xbf16>, vector<16x64xf32> -> vector<16x64xf32>
    %c0_6 = arith.constant 0 : index
    %c0_7 = arith.constant 0 : index
    %15 = vector.load %arg6[%c0_6, %c0_7] : memref<1x64xf32, #tpu.memory_space<vmem>>, vector<1x64xf32>
    %16 = vector.broadcast %15 : vector<1x64xf32> to vector<16x64xf32>
    %17 = arith.addf %14, %16 : vector<16x64xf32>
    %c0_8 = arith.constant 0 : index
    %c0_9 = arith.constant 0 : index
    %18 = vector.load %arg4[%c0_8, %c0_9] : memref<64x64xbf16, #tpu.memory_space<vmem>>, vector<64x64xbf16>
    %cst_10 = arith.constant dense<0.000000e+00> : vector<64x16xf32>
    %19 = tpu.matmul %18, %12, %cst_10 {dimension_numbers = #tpu.dot_dimension_numbers<[1], [1], [0], [0], [0, 0, 1, 0], [], []>} : vector<64x64xbf16>, vector<16x64xbf16>, vector<64x16xf32> -> vector<64x16xf32>
    %c0_11 = arith.constant 0 : index
    %c0_12 = arith.constant 0 : index
    %20 = vector.load %arg7[%c0_11, %c0_12] : memref<64x1xf32, #tpu.memory_space<vmem>>, vector<64x1xf32>
    %21 = vector.broadcast %20 : vector<64x1xf32> to vector<64x16xf32>
    %22 = arith.addf %19, %21 : vector<64x16xf32>
    %c0_13 = arith.constant 0 : index
    %c0_14 = arith.constant 0 : index
    %23 = vector.load %arg5[%c0_13, %c0_14] : memref<64x64xbf16, #tpu.memory_space<vmem>>, vector<64x64xbf16>
    %cst_15 = arith.constant dense<0.000000e+00> : vector<64x16xf32>
    %24 = tpu.matmul %23, %12, %cst_15 {dimension_numbers = #tpu.dot_dimension_numbers<[1], [1], [0], [0], [0, 0, 1, 0], [], []>} : vector<64x64xbf16>, vector<16x64xbf16>, vector<64x16xf32> -> vector<64x16xf32>
    %c0_16 = arith.constant 0 : index
    %c0_17 = arith.constant 0 : index
    %25 = vector.load %arg8[%c0_16, %c0_17] : memref<64x1xf32, #tpu.memory_space<vmem>>, vector<64x1xf32>
    %26 = vector.broadcast %25 : vector<64x1xf32> to vector<64x16xf32>
    %27 = arith.addf %24, %26 : vector<64x16xf32>
    %28 = tpu.iota {dimensions = array<i32: 1>} : vector<1x16xi32>
    %29 = arith.subi %6, %2 : i32
    %30 = arith.sitofp %29 : i32 to f32
    %cst_18 = arith.constant 1.000000e+00 : f32
    %31 = arith.maximumf %30, %cst_18 : f32
    %32 = vector.broadcast %2 : i32 to vector<1x16xi32>
    %33 = arith.cmpi sge, %28, %32 : vector<1x16xi32>
    %34 = vector.broadcast %6 : i32 to vector<1x16xi32>
    %35 = arith.cmpi slt, %28, %34 : vector<1x16xi32>
    %36 = arith.andi %33, %35 : vector<1x16xi1>
    %cst_19 = arith.constant 1.000000e+00 : f32
    %37 = arith.divf %cst_19, %31 : f32
    %cst_20 = arith.constant 0.000000e+00 : f32
    %38 = vector.broadcast %37 : f32 to vector<1x16xf32>
    %39 = vector.broadcast %cst_20 : f32 to vector<1x16xf32>
    %40 = arith.select %36, %38, %39 : vector<1x16xi1>, vector<1x16xf32>
    %41 = vector.broadcast %6 : i32 to vector<1x16xi32>
    %42 = arith.cmpi sge, %28, %41 : vector<1x16xi32>
    %43 = vector.broadcast %10 : i32 to vector<1x16xi32>
    %44 = arith.cmpi slt, %28, %43 : vector<1x16xi32>
    %45 = arith.andi %42, %44 : vector<1x16xi1>
    %46 = vector.broadcast %10 : i32 to vector<1x16xi32>
    %47 = arith.cmpi sge, %28, %46 : vector<1x16xi32>
    %cst_21 = arith.constant 0.000000e+00 : f32
    %48 = vector.broadcast %cst_21 : f32 to vector<2x4xf32>
    %49 = vector.extract_strided_slice %17 {offsets = [0, 0], sizes = [16, 8], strides = [1, 1]} : vector<16x64xf32> to vector<16x8xf32>
    %50 = vector.extract_strided_slice %22 {offsets = [0, 0], sizes = [8, 16], strides = [1, 1]} : vector<64x16xf32> to vector<8x16xf32>
    %51 = vector.extract_strided_slice %27 {offsets = [0, 0], sizes = [8, 16], strides = [1, 1]} : vector<64x16xf32> to vector<8x16xf32>
    %cst_22 = arith.constant dense<0.000000e+00> : vector<16x16xf32>
    %52 = tpu.matmul %49, %50, %cst_22 {dimension_numbers = #tpu.dot_dimension_numbers<[1], [0], [0], [1], [0, 0, 1, 1], [], []>} : vector<16x8xf32>, vector<8x16xf32>, vector<16x16xf32> -> vector<16x16xf32>
    %cst_23 = arith.constant -1.000000e+30 : f32
    %53 = vector.shape_cast %45 : vector<1x16xi1> to vector<1x16xi1>
    %54 = vector.broadcast %53 : vector<1x16xi1> to vector<16x16xi1>
    %55 = vector.broadcast %cst_23 : f32 to vector<16x16xf32>
    %56 = arith.select %54, %52, %55 : vector<16x16xi1>, vector<16x16xf32>
    %cst_24 = arith.constant dense<0xFF800000> : vector<16xf32>
    %57 = vector.multi_reduction <maximumf>, %56, %cst_24 [1] : vector<16x16xf32> to vector<16xf32>
    %58 = vector.shape_cast %57 : vector<16xf32> to vector<16x1xf32>
    %59 = vector.broadcast %58 : vector<16x1xf32> to vector<16x16xf32>
    %60 = arith.subf %56, %59 : vector<16x16xf32>
    %61 = math.exp %60 : vector<16x16xf32>
    %cst_25 = arith.constant dense<0.000000e+00> : vector<16xf32>
    %62 = vector.multi_reduction <add>, %61, %cst_25 [1] : vector<16x16xf32> to vector<16xf32>
    %63 = vector.shape_cast %62 : vector<16xf32> to vector<16x1xf32>
    %64 = tpu.reciprocal %63 {approx = true} : vector<16x1xf32> -> vector<16x1xf32>
    %65 = vector.broadcast %64 : vector<16x1xf32> to vector<16x16xf32>
    %66 = arith.mulf %61, %65 : vector<16x16xf32>
    %cst_26 = arith.constant dense<0.000000e+00> : vector<1x16xf32>
    %67 = tpu.matmul %40, %66, %cst_26 {dimension_numbers = #tpu.dot_dimension_numbers<[1], [0], [0], [1], [0, 0, 1, 1], [], []>} : vector<1x16xf32>, vector<16x16xf32>, vector<1x16xf32> -> vector<1x16xf32>
    %cst_27 = arith.constant -1.000000e+30 : f32
    %68 = vector.shape_cast %47 : vector<1x16xi1> to vector<1x16xi1>
    %69 = vector.broadcast %68 : vector<1x16xi1> to vector<16x16xi1>
    %70 = vector.broadcast %cst_27 : f32 to vector<16x16xf32>
    %71 = arith.select %69, %52, %70 : vector<16x16xi1>, vector<16x16xf32>
    %cst_28 = arith.constant dense<0xFF800000> : vector<16xf32>
    %72 = vector.multi_reduction <maximumf>, %71, %cst_28 [1] : vector<16x16xf32> to vector<16xf32>
    %73 = vector.shape_cast %72 : vector<16xf32> to vector<16x1xf32>
    %74 = vector.broadcast %73 : vector<16x1xf32> to vector<16x16xf32>
    %75 = arith.subf %71, %74 : vector<16x16xf32>
    %76 = math.exp %75 : vector<16x16xf32>
    %cst_29 = arith.constant dense<0.000000e+00> : vector<16xf32>
    %77 = vector.multi_reduction <add>, %76, %cst_29 [1] : vector<16x16xf32> to vector<16xf32>
    %78 = vector.shape_cast %77 : vector<16xf32> to vector<16x1xf32>
    %79 = tpu.reciprocal %78 {approx = true} : vector<16x1xf32> -> vector<16x1xf32>
    %80 = vector.broadcast %79 : vector<16x1xf32> to vector<16x16xf32>
    %81 = arith.mulf %76, %80 : vector<16x16xf32>
    %cst_30 = arith.constant dense<0.000000e+00> : vector<1x16xf32>
    %82 = tpu.matmul %40, %81, %cst_30 {dimension_numbers = #tpu.dot_dimension_numbers<[1], [0], [0], [1], [0, 0, 1, 1], [], []>} : vector<1x16xf32>, vector<16x16xf32>, vector<1x16xf32> -> vector<1x16xf32>
    %83 = tpu.concatenate %67, %82 in 0 : vector<1x16xf32>, vector<1x16xf32> -> vector<2x16xf32>
    %cst_31 = arith.constant dense<0.000000e+00> : vector<2x8xf32>
    %84 = tpu.matmul %83, %51, %cst_31 {dimension_numbers = #tpu.dot_dimension_numbers<[1], [1], [0], [0], [0, 0, 1, 0], [], []>} : vector<2x16xf32>, vector<8x16xf32>, vector<2x8xf32> -> vector<2x8xf32>
    %c0_32 = arith.constant 0 : index
    %c0_33 = arith.constant 0 : index
    %85 = vector.load %arg9[%c0_32, %c0_33] : memref<64x4xf32, #tpu.memory_space<vmem>>, vector<8x4xf32>
    %cst_34 = arith.constant dense<0.000000e+00> : vector<2x4xf32>
    %86 = tpu.matmul %84, %85, %cst_34 {dimension_numbers = #tpu.dot_dimension_numbers<[1], [0], [0], [1], [0, 0, 1, 1], [], []>} : vector<2x8xf32>, vector<8x4xf32>, vector<2x4xf32> -> vector<2x4xf32>
    %87 = arith.addf %48, %86 : vector<2x4xf32>
    %88 = vector.extract_strided_slice %17 {offsets = [0, 8], sizes = [16, 8], strides = [1, 1]} : vector<16x64xf32> to vector<16x8xf32>
    %89 = vector.extract_strided_slice %22 {offsets = [8, 0], sizes = [8, 16], strides = [1, 1]} : vector<64x16xf32> to vector<8x16xf32>
    %90 = vector.extract_strided_slice %27 {offsets = [8, 0], sizes = [8, 16], strides = [1, 1]} : vector<64x16xf32> to vector<8x16xf32>
    %cst_35 = arith.constant dense<0.000000e+00> : vector<16x16xf32>
    %91 = tpu.matmul %88, %89, %cst_35 {dimension_numbers = #tpu.dot_dimension_numbers<[1], [0], [0], [1], [0, 0, 1, 1], [], []>} : vector<16x8xf32>, vector<8x16xf32>, vector<16x16xf32> -> vector<16x16xf32>
    %cst_36 = arith.constant -1.000000e+30 : f32
    %92 = vector.shape_cast %45 : vector<1x16xi1> to vector<1x16xi1>
    %93 = vector.broadcast %92 : vector<1x16xi1> to vector<16x16xi1>
    %94 = vector.broadcast %cst_36 : f32 to vector<16x16xf32>
    %95 = arith.select %93, %91, %94 : vector<16x16xi1>, vector<16x16xf32>
    %cst_37 = arith.constant dense<0xFF800000> : vector<16xf32>
    %96 = vector.multi_reduction <maximumf>, %95, %cst_37 [1] : vector<16x16xf32> to vector<16xf32>
    %97 = vector.shape_cast %96 : vector<16xf32> to vector<16x1xf32>
    %98 = vector.broadcast %97 : vector<16x1xf32> to vector<16x16xf32>
    %99 = arith.subf %95, %98 : vector<16x16xf32>
    %100 = math.exp %99 : vector<16x16xf32>
    %cst_38 = arith.constant dense<0.000000e+00> : vector<16xf32>
    %101 = vector.multi_reduction <add>, %100, %cst_38 [1] : vector<16x16xf32> to vector<16xf32>
    %102 = vector.shape_cast %101 : vector<16xf32> to vector<16x1xf32>
    %103 = tpu.reciprocal %102 {approx = true} : vector<16x1xf32> -> vector<16x1xf32>
    %104 = vector.broadcast %103 : vector<16x1xf32> to vector<16x16xf32>
    %105 = arith.mulf %100, %104 : vector<16x16xf32>
    %cst_39 = arith.constant dense<0.000000e+00> : vector<1x16xf32>
    %106 = tpu.matmul %40, %105, %cst_39 {dimension_numbers = #tpu.dot_dimension_numbers<[1], [0], [0], [1], [0, 0, 1, 1], [], []>} : vector<1x16xf32>, vector<16x16xf32>, vector<1x16xf32> -> vector<1x16xf32>
    %cst_40 = arith.constant -1.000000e+30 : f32
    %107 = vector.shape_cast %47 : vector<1x16xi1> to vector<1x16xi1>
    %108 = vector.broadcast %107 : vector<1x16xi1> to vector<16x16xi1>
    %109 = vector.broadcast %cst_40 : f32 to vector<16x16xf32>
    %110 = arith.select %108, %91, %109 : vector<16x16xi1>, vector<16x16xf32>
    %cst_41 = arith.constant dense<0xFF800000> : vector<16xf32>
    %111 = vector.multi_reduction <maximumf>, %110, %cst_41 [1] : vector<16x16xf32> to vector<16xf32>
    %112 = vector.shape_cast %111 : vector<16xf32> to vector<16x1xf32>
    %113 = vector.broadcast %112 : vector<16x1xf32> to vector<16x16xf32>
    %114 = arith.subf %110, %113 : vector<16x16xf32>
    %115 = math.exp %114 : vector<16x16xf32>
    %cst_42 = arith.constant dense<0.000000e+00> : vector<16xf32>
    %116 = vector.multi_reduction <add>, %115, %cst_42 [1] : vector<16x16xf32> to vector<16xf32>
    %117 = vector.shape_cast %116 : vector<16xf32> to vector<16x1xf32>
    %118 = tpu.reciprocal %117 {approx = true} : vector<16x1xf32> -> vector<16x1xf32>
    %119 = vector.broadcast %118 : vector<16x1xf32> to vector<16x16xf32>
    %120 = arith.mulf %115, %119 : vector<16x16xf32>
    %cst_43 = arith.constant dense<0.000000e+00> : vector<1x16xf32>
    %121 = tpu.matmul %40, %120, %cst_43 {dimension_numbers = #tpu.dot_dimension_numbers<[1], [0], [0], [1], [0, 0, 1, 1], [], []>} : vector<1x16xf32>, vector<16x16xf32>, vector<1x16xf32> -> vector<1x16xf32>
    %122 = tpu.concatenate %106, %121 in 0 : vector<1x16xf32>, vector<1x16xf32> -> vector<2x16xf32>
    %cst_44 = arith.constant dense<0.000000e+00> : vector<2x8xf32>
    %123 = tpu.matmul %122, %90, %cst_44 {dimension_numbers = #tpu.dot_dimension_numbers<[1], [1], [0], [0], [0, 0, 1, 0], [], []>} : vector<2x16xf32>, vector<8x16xf32>, vector<2x8xf32> -> vector<2x8xf32>
    %c8 = arith.constant 8 : index
    %c0_45 = arith.constant 0 : index
    %124 = vector.load %arg9[%c8, %c0_45] : memref<64x4xf32, #tpu.memory_space<vmem>>, vector<8x4xf32>
    %cst_46 = arith.constant dense<0.000000e+00> : vector<2x4xf32>
    %125 = tpu.matmul %123, %124, %cst_46 {dimension_numbers = #tpu.dot_dimension_numbers<[1], [0], [0], [1], [0, 0, 1, 1], [], []>} : vector<2x8xf32>, vector<8x4xf32>, vector<2x4xf32> -> vector<2x4xf32>
    %126 = arith.addf %87, %125 : vector<2x4xf32>
    %127 = vector.extract_strided_slice %17 {offsets = [0, 16], sizes = [16, 8], strides = [1, 1]} : vector<16x64xf32> to vector<16x8xf32>
    %128 = vector.extract_strided_slice %22 {offsets = [16, 0], sizes = [8, 16], strides = [1, 1]} : vector<64x16xf32> to vector<8x16xf32>
    %129 = vector.extract_strided_slice %27 {offsets = [16, 0], sizes = [8, 16], strides = [1, 1]} : vector<64x16xf32> to vector<8x16xf32>
    %cst_47 = arith.constant dense<0.000000e+00> : vector<16x16xf32>
    %130 = tpu.matmul %127, %128, %cst_47 {dimension_numbers = #tpu.dot_dimension_numbers<[1], [0], [0], [1], [0, 0, 1, 1], [], []>} : vector<16x8xf32>, vector<8x16xf32>, vector<16x16xf32> -> vector<16x16xf32>
    %cst_48 = arith.constant -1.000000e+30 : f32
    %131 = vector.shape_cast %45 : vector<1x16xi1> to vector<1x16xi1>
    %132 = vector.broadcast %131 : vector<1x16xi1> to vector<16x16xi1>
    %133 = vector.broadcast %cst_48 : f32 to vector<16x16xf32>
    %134 = arith.select %132, %130, %133 : vector<16x16xi1>, vector<16x16xf32>
    %cst_49 = arith.constant dense<0xFF800000> : vector<16xf32>
    %135 = vector.multi_reduction <maximumf>, %134, %cst_49 [1] : vector<16x16xf32> to vector<16xf32>
    %136 = vector.shape_cast %135 : vector<16xf32> to vector<16x1xf32>
    %137 = vector.broadcast %136 : vector<16x1xf32> to vector<16x16xf32>
    %138 = arith.subf %134, %137 : vector<16x16xf32>
    %139 = math.exp %138 : vector<16x16xf32>
    %cst_50 = arith.constant dense<0.000000e+00> : vector<16xf32>
    %140 = vector.multi_reduction <add>, %139, %cst_50 [1] : vector<16x16xf32> to vector<16xf32>
    %141 = vector.shape_cast %140 : vector<16xf32> to vector<16x1xf32>
    %142 = tpu.reciprocal %141 {approx = true} : vector<16x1xf32> -> vector<16x1xf32>
    %143 = vector.broadcast %142 : vector<16x1xf32> to vector<16x16xf32>
    %144 = arith.mulf %139, %143 : vector<16x16xf32>
    %cst_51 = arith.constant dense<0.000000e+00> : vector<1x16xf32>
    %145 = tpu.matmul %40, %144, %cst_51 {dimension_numbers = #tpu.dot_dimension_numbers<[1], [0], [0], [1], [0, 0, 1, 1], [], []>} : vector<1x16xf32>, vector<16x16xf32>, vector<1x16xf32> -> vector<1x16xf32>
    %cst_52 = arith.constant -1.000000e+30 : f32
    %146 = vector.shape_cast %47 : vector<1x16xi1> to vector<1x16xi1>
    %147 = vector.broadcast %146 : vector<1x16xi1> to vector<16x16xi1>
    %148 = vector.broadcast %cst_52 : f32 to vector<16x16xf32>
    %149 = arith.select %147, %130, %148 : vector<16x16xi1>, vector<16x16xf32>
    %cst_53 = arith.constant dense<0xFF800000> : vector<16xf32>
    %150 = vector.multi_reduction <maximumf>, %149, %cst_53 [1] : vector<16x16xf32> to vector<16xf32>
    %151 = vector.shape_cast %150 : vector<16xf32> to vector<16x1xf32>
    %152 = vector.broadcast %151 : vector<16x1xf32> to vector<16x16xf32>
    %153 = arith.subf %149, %152 : vector<16x16xf32>
    %154 = math.exp %153 : vector<16x16xf32>
    %cst_54 = arith.constant dense<0.000000e+00> : vector<16xf32>
    %155 = vector.multi_reduction <add>, %154, %cst_54 [1] : vector<16x16xf32> to vector<16xf32>
    %156 = vector.shape_cast %155 : vector<16xf32> to vector<16x1xf32>
    %157 = tpu.reciprocal %156 {approx = true} : vector<16x1xf32> -> vector<16x1xf32>
    %158 = vector.broadcast %157 : vector<16x1xf32> to vector<16x16xf32>
    %159 = arith.mulf %154, %158 : vector<16x16xf32>
    %cst_55 = arith.constant dense<0.000000e+00> : vector<1x16xf32>
    %160 = tpu.matmul %40, %159, %cst_55 {dimension_numbers = #tpu.dot_dimension_numbers<[1], [0], [0], [1], [0, 0, 1, 1], [], []>} : vector<1x16xf32>, vector<16x16xf32>, vector<1x16xf32> -> vector<1x16xf32>
    %161 = tpu.concatenate %145, %160 in 0 : vector<1x16xf32>, vector<1x16xf32> -> vector<2x16xf32>
    %cst_56 = arith.constant dense<0.000000e+00> : vector<2x8xf32>
    %162 = tpu.matmul %161, %129, %cst_56 {dimension_numbers = #tpu.dot_dimension_numbers<[1], [1], [0], [0], [0, 0, 1, 0], [], []>} : vector<2x16xf32>, vector<8x16xf32>, vector<2x8xf32> -> vector<2x8xf32>
    %c16 = arith.constant 16 : index
    %c0_57 = arith.constant 0 : index
    %163 = vector.load %arg9[%c16, %c0_57] : memref<64x4xf32, #tpu.memory_space<vmem>>, vector<8x4xf32>
    %cst_58 = arith.constant dense<0.000000e+00> : vector<2x4xf32>
    %164 = tpu.matmul %162, %163, %cst_58 {dimension_numbers = #tpu.dot_dimension_numbers<[1], [0], [0], [1], [0, 0, 1, 1], [], []>} : vector<2x8xf32>, vector<8x4xf32>, vector<2x4xf32> -> vector<2x4xf32>
    %165 = arith.addf %126, %164 : vector<2x4xf32>
    %166 = vector.extract_strided_slice %17 {offsets = [0, 24], sizes = [16, 8], strides = [1, 1]} : vector<16x64xf32> to vector<16x8xf32>
    %167 = vector.extract_strided_slice %22 {offsets = [24, 0], sizes = [8, 16], strides = [1, 1]} : vector<64x16xf32> to vector<8x16xf32>
    %168 = vector.extract_strided_slice %27 {offsets = [24, 0], sizes = [8, 16], strides = [1, 1]} : vector<64x16xf32> to vector<8x16xf32>
    %cst_59 = arith.constant dense<0.000000e+00> : vector<16x16xf32>
    %169 = tpu.matmul %166, %167, %cst_59 {dimension_numbers = #tpu.dot_dimension_numbers<[1], [0], [0], [1], [0, 0, 1, 1], [], []>} : vector<16x8xf32>, vector<8x16xf32>, vector<16x16xf32> -> vector<16x16xf32>
    %cst_60 = arith.constant -1.000000e+30 : f32
    %170 = vector.shape_cast %45 : vector<1x16xi1> to vector<1x16xi1>
    %171 = vector.broadcast %170 : vector<1x16xi1> to vector<16x16xi1>
    %172 = vector.broadcast %cst_60 : f32 to vector<16x16xf32>
    %173 = arith.select %171, %169, %172 : vector<16x16xi1>, vector<16x16xf32>
    %cst_61 = arith.constant dense<0xFF800000> : vector<16xf32>
    %174 = vector.multi_reduction <maximumf>, %173, %cst_61 [1] : vector<16x16xf32> to vector<16xf32>
    %175 = vector.shape_cast %174 : vector<16xf32> to vector<16x1xf32>
    %176 = vector.broadcast %175 : vector<16x1xf32> to vector<16x16xf32>
    %177 = arith.subf %173, %176 : vector<16x16xf32>
    %178 = math.exp %177 : vector<16x16xf32>
    %cst_62 = arith.constant dense<0.000000e+00> : vector<16xf32>
    %179 = vector.multi_reduction <add>, %178, %cst_62 [1] : vector<16x16xf32> to vector<16xf32>
    %180 = vector.shape_cast %179 : vector<16xf32> to vector<16x1xf32>
    %181 = tpu.reciprocal %180 {approx = true} : vector<16x1xf32> -> vector<16x1xf32>
    %182 = vector.broadcast %181 : vector<16x1xf32> to vector<16x16xf32>
    %183 = arith.mulf %178, %182 : vector<16x16xf32>
    %cst_63 = arith.constant dense<0.000000e+00> : vector<1x16xf32>
    %184 = tpu.matmul %40, %183, %cst_63 {dimension_numbers = #tpu.dot_dimension_numbers<[1], [0], [0], [1], [0, 0, 1, 1], [], []>} : vector<1x16xf32>, vector<16x16xf32>, vector<1x16xf32> -> vector<1x16xf32>
    %cst_64 = arith.constant -1.000000e+30 : f32
    %185 = vector.shape_cast %47 : vector<1x16xi1> to vector<1x16xi1>
    %186 = vector.broadcast %185 : vector<1x16xi1> to vector<16x16xi1>
    %187 = vector.broadcast %cst_64 : f32 to vector<16x16xf32>
    %188 = arith.select %186, %169, %187 : vector<16x16xi1>, vector<16x16xf32>
    %cst_65 = arith.constant dense<0xFF800000> : vector<16xf32>
    %189 = vector.multi_reduction <maximumf>, %188, %cst_65 [1] : vector<16x16xf32> to vector<16xf32>
    %190 = vector.shape_cast %189 : vector<16xf32> to vector<16x1xf32>
    %191 = vector.broadcast %190 : vector<16x1xf32> to vector<16x16xf32>
    %192 = arith.subf %188, %191 : vector<16x16xf32>
    %193 = math.exp %192 : vector<16x16xf32>
    %cst_66 = arith.constant dense<0.000000e+00> : vector<16xf32>
    %194 = vector.multi_reduction <add>, %193, %cst_66 [1] : vector<16x16xf32> to vector<16xf32>
    %195 = vector.shape_cast %194 : vector<16xf32> to vector<16x1xf32>
    %196 = tpu.reciprocal %195 {approx = true} : vector<16x1xf32> -> vector<16x1xf32>
    %197 = vector.broadcast %196 : vector<16x1xf32> to vector<16x16xf32>
    %198 = arith.mulf %193, %197 : vector<16x16xf32>
    %cst_67 = arith.constant dense<0.000000e+00> : vector<1x16xf32>
    %199 = tpu.matmul %40, %198, %cst_67 {dimension_numbers = #tpu.dot_dimension_numbers<[1], [0], [0], [1], [0, 0, 1, 1], [], []>} : vector<1x16xf32>, vector<16x16xf32>, vector<1x16xf32> -> vector<1x16xf32>
    %200 = tpu.concatenate %184, %199 in 0 : vector<1x16xf32>, vector<1x16xf32> -> vector<2x16xf32>
    %cst_68 = arith.constant dense<0.000000e+00> : vector<2x8xf32>
    %201 = tpu.matmul %200, %168, %cst_68 {dimension_numbers = #tpu.dot_dimension_numbers<[1], [1], [0], [0], [0, 0, 1, 0], [], []>} : vector<2x16xf32>, vector<8x16xf32>, vector<2x8xf32> -> vector<2x8xf32>
    %c24 = arith.constant 24 : index
    %c0_69 = arith.constant 0 : index
    %202 = vector.load %arg9[%c24, %c0_69] : memref<64x4xf32, #tpu.memory_space<vmem>>, vector<8x4xf32>
    %cst_70 = arith.constant dense<0.000000e+00> : vector<2x4xf32>
    %203 = tpu.matmul %201, %202, %cst_70 {dimension_numbers = #tpu.dot_dimension_numbers<[1], [0], [0], [1], [0, 0, 1, 1], [], []>} : vector<2x8xf32>, vector<8x4xf32>, vector<2x4xf32> -> vector<2x4xf32>
    %204 = arith.addf %165, %203 : vector<2x4xf32>
    %205 = vector.extract_strided_slice %17 {offsets = [0, 32], sizes = [16, 8], strides = [1, 1]} : vector<16x64xf32> to vector<16x8xf32>
    %206 = vector.extract_strided_slice %22 {offsets = [32, 0], sizes = [8, 16], strides = [1, 1]} : vector<64x16xf32> to vector<8x16xf32>
    %207 = vector.extract_strided_slice %27 {offsets = [32, 0], sizes = [8, 16], strides = [1, 1]} : vector<64x16xf32> to vector<8x16xf32>
    %cst_71 = arith.constant dense<0.000000e+00> : vector<16x16xf32>
    %208 = tpu.matmul %205, %206, %cst_71 {dimension_numbers = #tpu.dot_dimension_numbers<[1], [0], [0], [1], [0, 0, 1, 1], [], []>} : vector<16x8xf32>, vector<8x16xf32>, vector<16x16xf32> -> vector<16x16xf32>
    %cst_72 = arith.constant -1.000000e+30 : f32
    %209 = vector.shape_cast %45 : vector<1x16xi1> to vector<1x16xi1>
    %210 = vector.broadcast %209 : vector<1x16xi1> to vector<16x16xi1>
    %211 = vector.broadcast %cst_72 : f32 to vector<16x16xf32>
    %212 = arith.select %210, %208, %211 : vector<16x16xi1>, vector<16x16xf32>
    %cst_73 = arith.constant dense<0xFF800000> : vector<16xf32>
    %213 = vector.multi_reduction <maximumf>, %212, %cst_73 [1] : vector<16x16xf32> to vector<16xf32>
    %214 = vector.shape_cast %213 : vector<16xf32> to vector<16x1xf32>
    %215 = vector.broadcast %214 : vector<16x1xf32> to vector<16x16xf32>
    %216 = arith.subf %212, %215 : vector<16x16xf32>
    %217 = math.exp %216 : vector<16x16xf32>
    %cst_74 = arith.constant dense<0.000000e+00> : vector<16xf32>
    %218 = vector.multi_reduction <add>, %217, %cst_74 [1] : vector<16x16xf32> to vector<16xf32>
    %219 = vector.shape_cast %218 : vector<16xf32> to vector<16x1xf32>
    %220 = tpu.reciprocal %219 {approx = true} : vector<16x1xf32> -> vector<16x1xf32>
    %221 = vector.broadcast %220 : vector<16x1xf32> to vector<16x16xf32>
    %222 = arith.mulf %217, %221 : vector<16x16xf32>
    %cst_75 = arith.constant dense<0.000000e+00> : vector<1x16xf32>
    %223 = tpu.matmul %40, %222, %cst_75 {dimension_numbers = #tpu.dot_dimension_numbers<[1], [0], [0], [1], [0, 0, 1, 1], [], []>} : vector<1x16xf32>, vector<16x16xf32>, vector<1x16xf32> -> vector<1x16xf32>
    %cst_76 = arith.constant -1.000000e+30 : f32
    %224 = vector.shape_cast %47 : vector<1x16xi1> to vector<1x16xi1>
    %225 = vector.broadcast %224 : vector<1x16xi1> to vector<16x16xi1>
    %226 = vector.broadcast %cst_76 : f32 to vector<16x16xf32>
    %227 = arith.select %225, %208, %226 : vector<16x16xi1>, vector<16x16xf32>
    %cst_77 = arith.constant dense<0xFF800000> : vector<16xf32>
    %228 = vector.multi_reduction <maximumf>, %227, %cst_77 [1] : vector<16x16xf32> to vector<16xf32>
    %229 = vector.shape_cast %228 : vector<16xf32> to vector<16x1xf32>
    %230 = vector.broadcast %229 : vector<16x1xf32> to vector<16x16xf32>
    %231 = arith.subf %227, %230 : vector<16x16xf32>
    %232 = math.exp %231 : vector<16x16xf32>
    %cst_78 = arith.constant dense<0.000000e+00> : vector<16xf32>
    %233 = vector.multi_reduction <add>, %232, %cst_78 [1] : vector<16x16xf32> to vector<16xf32>
    %234 = vector.shape_cast %233 : vector<16xf32> to vector<16x1xf32>
    %235 = tpu.reciprocal %234 {approx = true} : vector<16x1xf32> -> vector<16x1xf32>
    %236 = vector.broadcast %235 : vector<16x1xf32> to vector<16x16xf32>
    %237 = arith.mulf %232, %236 : vector<16x16xf32>
    %cst_79 = arith.constant dense<0.000000e+00> : vector<1x16xf32>
    %238 = tpu.matmul %40, %237, %cst_79 {dimension_numbers = #tpu.dot_dimension_numbers<[1], [0], [0], [1], [0, 0, 1, 1], [], []>} : vector<1x16xf32>, vector<16x16xf32>, vector<1x16xf32> -> vector<1x16xf32>
    %239 = tpu.concatenate %223, %238 in 0 : vector<1x16xf32>, vector<1x16xf32> -> vector<2x16xf32>
    %cst_80 = arith.constant dense<0.000000e+00> : vector<2x8xf32>
    %240 = tpu.matmul %239, %207, %cst_80 {dimension_numbers = #tpu.dot_dimension_numbers<[1], [1], [0], [0], [0, 0, 1, 0], [], []>} : vector<2x16xf32>, vector<8x16xf32>, vector<2x8xf32> -> vector<2x8xf32>
    %c32 = arith.constant 32 : index
    %c0_81 = arith.constant 0 : index
    %241 = vector.load %arg9[%c32, %c0_81] : memref<64x4xf32, #tpu.memory_space<vmem>>, vector<8x4xf32>
    %cst_82 = arith.constant dense<0.000000e+00> : vector<2x4xf32>
    %242 = tpu.matmul %240, %241, %cst_82 {dimension_numbers = #tpu.dot_dimension_numbers<[1], [0], [0], [1], [0, 0, 1, 1], [], []>} : vector<2x8xf32>, vector<8x4xf32>, vector<2x4xf32> -> vector<2x4xf32>
    %243 = arith.addf %204, %242 : vector<2x4xf32>
    %244 = vector.extract_strided_slice %17 {offsets = [0, 40], sizes = [16, 8], strides = [1, 1]} : vector<16x64xf32> to vector<16x8xf32>
    %245 = vector.extract_strided_slice %22 {offsets = [40, 0], sizes = [8, 16], strides = [1, 1]} : vector<64x16xf32> to vector<8x16xf32>
    %246 = vector.extract_strided_slice %27 {offsets = [40, 0], sizes = [8, 16], strides = [1, 1]} : vector<64x16xf32> to vector<8x16xf32>
    %cst_83 = arith.constant dense<0.000000e+00> : vector<16x16xf32>
    %247 = tpu.matmul %244, %245, %cst_83 {dimension_numbers = #tpu.dot_dimension_numbers<[1], [0], [0], [1], [0, 0, 1, 1], [], []>} : vector<16x8xf32>, vector<8x16xf32>, vector<16x16xf32> -> vector<16x16xf32>
    %cst_84 = arith.constant -1.000000e+30 : f32
    %248 = vector.shape_cast %45 : vector<1x16xi1> to vector<1x16xi1>
    %249 = vector.broadcast %248 : vector<1x16xi1> to vector<16x16xi1>
    %250 = vector.broadcast %cst_84 : f32 to vector<16x16xf32>
    %251 = arith.select %249, %247, %250 : vector<16x16xi1>, vector<16x16xf32>
    %cst_85 = arith.constant dense<0xFF800000> : vector<16xf32>
    %252 = vector.multi_reduction <maximumf>, %251, %cst_85 [1] : vector<16x16xf32> to vector<16xf32>
    %253 = vector.shape_cast %252 : vector<16xf32> to vector<16x1xf32>
    %254 = vector.broadcast %253 : vector<16x1xf32> to vector<16x16xf32>
    %255 = arith.subf %251, %254 : vector<16x16xf32>
    %256 = math.exp %255 : vector<16x16xf32>
    %cst_86 = arith.constant dense<0.000000e+00> : vector<16xf32>
    %257 = vector.multi_reduction <add>, %256, %cst_86 [1] : vector<16x16xf32> to vector<16xf32>
    %258 = vector.shape_cast %257 : vector<16xf32> to vector<16x1xf32>
    %259 = tpu.reciprocal %258 {approx = true} : vector<16x1xf32> -> vector<16x1xf32>
    %260 = vector.broadcast %259 : vector<16x1xf32> to vector<16x16xf32>
    %261 = arith.mulf %256, %260 : vector<16x16xf32>
    %cst_87 = arith.constant dense<0.000000e+00> : vector<1x16xf32>
    %262 = tpu.matmul %40, %261, %cst_87 {dimension_numbers = #tpu.dot_dimension_numbers<[1], [0], [0], [1], [0, 0, 1, 1], [], []>} : vector<1x16xf32>, vector<16x16xf32>, vector<1x16xf32> -> vector<1x16xf32>
    %cst_88 = arith.constant -1.000000e+30 : f32
    %263 = vector.shape_cast %47 : vector<1x16xi1> to vector<1x16xi1>
    %264 = vector.broadcast %263 : vector<1x16xi1> to vector<16x16xi1>
    %265 = vector.broadcast %cst_88 : f32 to vector<16x16xf32>
    %266 = arith.select %264, %247, %265 : vector<16x16xi1>, vector<16x16xf32>
    %cst_89 = arith.constant dense<0xFF800000> : vector<16xf32>
    %267 = vector.multi_reduction <maximumf>, %266, %cst_89 [1] : vector<16x16xf32> to vector<16xf32>
    %268 = vector.shape_cast %267 : vector<16xf32> to vector<16x1xf32>
    %269 = vector.broadcast %268 : vector<16x1xf32> to vector<16x16xf32>
    %270 = arith.subf %266, %269 : vector<16x16xf32>
    %271 = math.exp %270 : vector<16x16xf32>
    %cst_90 = arith.constant dense<0.000000e+00> : vector<16xf32>
    %272 = vector.multi_reduction <add>, %271, %cst_90 [1] : vector<16x16xf32> to vector<16xf32>
    %273 = vector.shape_cast %272 : vector<16xf32> to vector<16x1xf32>
    %274 = tpu.reciprocal %273 {approx = true} : vector<16x1xf32> -> vector<16x1xf32>
    %275 = vector.broadcast %274 : vector<16x1xf32> to vector<16x16xf32>
    %276 = arith.mulf %271, %275 : vector<16x16xf32>
    %cst_91 = arith.constant dense<0.000000e+00> : vector<1x16xf32>
    %277 = tpu.matmul %40, %276, %cst_91 {dimension_numbers = #tpu.dot_dimension_numbers<[1], [0], [0], [1], [0, 0, 1, 1], [], []>} : vector<1x16xf32>, vector<16x16xf32>, vector<1x16xf32> -> vector<1x16xf32>
    %278 = tpu.concatenate %262, %277 in 0 : vector<1x16xf32>, vector<1x16xf32> -> vector<2x16xf32>
    %cst_92 = arith.constant dense<0.000000e+00> : vector<2x8xf32>
    %279 = tpu.matmul %278, %246, %cst_92 {dimension_numbers = #tpu.dot_dimension_numbers<[1], [1], [0], [0], [0, 0, 1, 0], [], []>} : vector<2x16xf32>, vector<8x16xf32>, vector<2x8xf32> -> vector<2x8xf32>
    %c40 = arith.constant 40 : index
    %c0_93 = arith.constant 0 : index
    %280 = vector.load %arg9[%c40, %c0_93] : memref<64x4xf32, #tpu.memory_space<vmem>>, vector<8x4xf32>
    %cst_94 = arith.constant dense<0.000000e+00> : vector<2x4xf32>
    %281 = tpu.matmul %279, %280, %cst_94 {dimension_numbers = #tpu.dot_dimension_numbers<[1], [0], [0], [1], [0, 0, 1, 1], [], []>} : vector<2x8xf32>, vector<8x4xf32>, vector<2x4xf32> -> vector<2x4xf32>
    %282 = arith.addf %243, %281 : vector<2x4xf32>
    %283 = vector.extract_strided_slice %17 {offsets = [0, 48], sizes = [16, 8], strides = [1, 1]} : vector<16x64xf32> to vector<16x8xf32>
    %284 = vector.extract_strided_slice %22 {offsets = [48, 0], sizes = [8, 16], strides = [1, 1]} : vector<64x16xf32> to vector<8x16xf32>
    %285 = vector.extract_strided_slice %27 {offsets = [48, 0], sizes = [8, 16], strides = [1, 1]} : vector<64x16xf32> to vector<8x16xf32>
    %cst_95 = arith.constant dense<0.000000e+00> : vector<16x16xf32>
    %286 = tpu.matmul %283, %284, %cst_95 {dimension_numbers = #tpu.dot_dimension_numbers<[1], [0], [0], [1], [0, 0, 1, 1], [], []>} : vector<16x8xf32>, vector<8x16xf32>, vector<16x16xf32> -> vector<16x16xf32>
    %cst_96 = arith.constant -1.000000e+30 : f32
    %287 = vector.shape_cast %45 : vector<1x16xi1> to vector<1x16xi1>
    %288 = vector.broadcast %287 : vector<1x16xi1> to vector<16x16xi1>
    %289 = vector.broadcast %cst_96 : f32 to vector<16x16xf32>
    %290 = arith.select %288, %286, %289 : vector<16x16xi1>, vector<16x16xf32>
    %cst_97 = arith.constant dense<0xFF800000> : vector<16xf32>
    %291 = vector.multi_reduction <maximumf>, %290, %cst_97 [1] : vector<16x16xf32> to vector<16xf32>
    %292 = vector.shape_cast %291 : vector<16xf32> to vector<16x1xf32>
    %293 = vector.broadcast %292 : vector<16x1xf32> to vector<16x16xf32>
    %294 = arith.subf %290, %293 : vector<16x16xf32>
    %295 = math.exp %294 : vector<16x16xf32>
    %cst_98 = arith.constant dense<0.000000e+00> : vector<16xf32>
    %296 = vector.multi_reduction <add>, %295, %cst_98 [1] : vector<16x16xf32> to vector<16xf32>
    %297 = vector.shape_cast %296 : vector<16xf32> to vector<16x1xf32>
    %298 = tpu.reciprocal %297 {approx = true} : vector<16x1xf32> -> vector<16x1xf32>
    %299 = vector.broadcast %298 : vector<16x1xf32> to vector<16x16xf32>
    %300 = arith.mulf %295, %299 : vector<16x16xf32>
    %cst_99 = arith.constant dense<0.000000e+00> : vector<1x16xf32>
    %301 = tpu.matmul %40, %300, %cst_99 {dimension_numbers = #tpu.dot_dimension_numbers<[1], [0], [0], [1], [0, 0, 1, 1], [], []>} : vector<1x16xf32>, vector<16x16xf32>, vector<1x16xf32> -> vector<1x16xf32>
    %cst_100 = arith.constant -1.000000e+30 : f32
    %302 = vector.shape_cast %47 : vector<1x16xi1> to vector<1x16xi1>
    %303 = vector.broadcast %302 : vector<1x16xi1> to vector<16x16xi1>
    %304 = vector.broadcast %cst_100 : f32 to vector<16x16xf32>
    %305 = arith.select %303, %286, %304 : vector<16x16xi1>, vector<16x16xf32>
    %cst_101 = arith.constant dense<0xFF800000> : vector<16xf32>
    %306 = vector.multi_reduction <maximumf>, %305, %cst_101 [1] : vector<16x16xf32> to vector<16xf32>
    %307 = vector.shape_cast %306 : vector<16xf32> to vector<16x1xf32>
    %308 = vector.broadcast %307 : vector<16x1xf32> to vector<16x16xf32>
    %309 = arith.subf %305, %308 : vector<16x16xf32>
    %310 = math.exp %309 : vector<16x16xf32>
    %cst_102 = arith.constant dense<0.000000e+00> : vector<16xf32>
    %311 = vector.multi_reduction <add>, %310, %cst_102 [1] : vector<16x16xf32> to vector<16xf32>
    %312 = vector.shape_cast %311 : vector<16xf32> to vector<16x1xf32>
    %313 = tpu.reciprocal %312 {approx = true} : vector<16x1xf32> -> vector<16x1xf32>
    %314 = vector.broadcast %313 : vector<16x1xf32> to vector<16x16xf32>
    %315 = arith.mulf %310, %314 : vector<16x16xf32>
    %cst_103 = arith.constant dense<0.000000e+00> : vector<1x16xf32>
    %316 = tpu.matmul %40, %315, %cst_103 {dimension_numbers = #tpu.dot_dimension_numbers<[1], [0], [0], [1], [0, 0, 1, 1], [], []>} : vector<1x16xf32>, vector<16x16xf32>, vector<1x16xf32> -> vector<1x16xf32>
    %317 = tpu.concatenate %301, %316 in 0 : vector<1x16xf32>, vector<1x16xf32> -> vector<2x16xf32>
    %cst_104 = arith.constant dense<0.000000e+00> : vector<2x8xf32>
    %318 = tpu.matmul %317, %285, %cst_104 {dimension_numbers = #tpu.dot_dimension_numbers<[1], [1], [0], [0], [0, 0, 1, 0], [], []>} : vector<2x16xf32>, vector<8x16xf32>, vector<2x8xf32> -> vector<2x8xf32>
    %c48 = arith.constant 48 : index
    %c0_105 = arith.constant 0 : index
    %319 = vector.load %arg9[%c48, %c0_105] : memref<64x4xf32, #tpu.memory_space<vmem>>, vector<8x4xf32>
    %cst_106 = arith.constant dense<0.000000e+00> : vector<2x4xf32>
    %320 = tpu.matmul %318, %319, %cst_106 {dimension_numbers = #tpu.dot_dimension_numbers<[1], [0], [0], [1], [0, 0, 1, 1], [], []>} : vector<2x8xf32>, vector<8x4xf32>, vector<2x4xf32> -> vector<2x4xf32>
    %321 = arith.addf %282, %320 : vector<2x4xf32>
    %322 = vector.extract_strided_slice %17 {offsets = [0, 56], sizes = [16, 8], strides = [1, 1]} : vector<16x64xf32> to vector<16x8xf32>
    %323 = vector.extract_strided_slice %22 {offsets = [56, 0], sizes = [8, 16], strides = [1, 1]} : vector<64x16xf32> to vector<8x16xf32>
    %324 = vector.extract_strided_slice %27 {offsets = [56, 0], sizes = [8, 16], strides = [1, 1]} : vector<64x16xf32> to vector<8x16xf32>
    %cst_107 = arith.constant dense<0.000000e+00> : vector<16x16xf32>
    %325 = tpu.matmul %322, %323, %cst_107 {dimension_numbers = #tpu.dot_dimension_numbers<[1], [0], [0], [1], [0, 0, 1, 1], [], []>} : vector<16x8xf32>, vector<8x16xf32>, vector<16x16xf32> -> vector<16x16xf32>
    %cst_108 = arith.constant -1.000000e+30 : f32
    %326 = vector.shape_cast %45 : vector<1x16xi1> to vector<1x16xi1>
    %327 = vector.broadcast %326 : vector<1x16xi1> to vector<16x16xi1>
    %328 = vector.broadcast %cst_108 : f32 to vector<16x16xf32>
    %329 = arith.select %327, %325, %328 : vector<16x16xi1>, vector<16x16xf32>
    %cst_109 = arith.constant dense<0xFF800000> : vector<16xf32>
    %330 = vector.multi_reduction <maximumf>, %329, %cst_109 [1] : vector<16x16xf32> to vector<16xf32>
    %331 = vector.shape_cast %330 : vector<16xf32> to vector<16x1xf32>
    %332 = vector.broadcast %331 : vector<16x1xf32> to vector<16x16xf32>
    %333 = arith.subf %329, %332 : vector<16x16xf32>
    %334 = math.exp %333 : vector<16x16xf32>
    %cst_110 = arith.constant dense<0.000000e+00> : vector<16xf32>
    %335 = vector.multi_reduction <add>, %334, %cst_110 [1] : vector<16x16xf32> to vector<16xf32>
    %336 = vector.shape_cast %335 : vector<16xf32> to vector<16x1xf32>
    %337 = tpu.reciprocal %336 {approx = true} : vector<16x1xf32> -> vector<16x1xf32>
    %338 = vector.broadcast %337 : vector<16x1xf32> to vector<16x16xf32>
    %339 = arith.mulf %334, %338 : vector<16x16xf32>
    %cst_111 = arith.constant dense<0.000000e+00> : vector<1x16xf32>
    %340 = tpu.matmul %40, %339, %cst_111 {dimension_numbers = #tpu.dot_dimension_numbers<[1], [0], [0], [1], [0, 0, 1, 1], [], []>} : vector<1x16xf32>, vector<16x16xf32>, vector<1x16xf32> -> vector<1x16xf32>
    %cst_112 = arith.constant -1.000000e+30 : f32
    %341 = vector.shape_cast %47 : vector<1x16xi1> to vector<1x16xi1>
    %342 = vector.broadcast %341 : vector<1x16xi1> to vector<16x16xi1>
    %343 = vector.broadcast %cst_112 : f32 to vector<16x16xf32>
    %344 = arith.select %342, %325, %343 : vector<16x16xi1>, vector<16x16xf32>
    %cst_113 = arith.constant dense<0xFF800000> : vector<16xf32>
    %345 = vector.multi_reduction <maximumf>, %344, %cst_113 [1] : vector<16x16xf32> to vector<16xf32>
    %346 = vector.shape_cast %345 : vector<16xf32> to vector<16x1xf32>
    %347 = vector.broadcast %346 : vector<16x1xf32> to vector<16x16xf32>
    %348 = arith.subf %344, %347 : vector<16x16xf32>
    %349 = math.exp %348 : vector<16x16xf32>
    %cst_114 = arith.constant dense<0.000000e+00> : vector<16xf32>
    %350 = vector.multi_reduction <add>, %349, %cst_114 [1] : vector<16x16xf32> to vector<16xf32>
    %351 = vector.shape_cast %350 : vector<16xf32> to vector<16x1xf32>
    %352 = tpu.reciprocal %351 {approx = true} : vector<16x1xf32> -> vector<16x1xf32>
    %353 = vector.broadcast %352 : vector<16x1xf32> to vector<16x16xf32>
    %354 = arith.mulf %349, %353 : vector<16x16xf32>
    %cst_115 = arith.constant dense<0.000000e+00> : vector<1x16xf32>
    %355 = tpu.matmul %40, %354, %cst_115 {dimension_numbers = #tpu.dot_dimension_numbers<[1], [0], [0], [1], [0, 0, 1, 1], [], []>} : vector<1x16xf32>, vector<16x16xf32>, vector<1x16xf32> -> vector<1x16xf32>
    %356 = tpu.concatenate %340, %355 in 0 : vector<1x16xf32>, vector<1x16xf32> -> vector<2x16xf32>
    %cst_116 = arith.constant dense<0.000000e+00> : vector<2x8xf32>
    %357 = tpu.matmul %356, %324, %cst_116 {dimension_numbers = #tpu.dot_dimension_numbers<[1], [1], [0], [0], [0, 0, 1, 0], [], []>} : vector<2x16xf32>, vector<8x16xf32>, vector<2x8xf32> -> vector<2x8xf32>
    %c56 = arith.constant 56 : index
    %c0_117 = arith.constant 0 : index
    %358 = vector.load %arg9[%c56, %c0_117] : memref<64x4xf32, #tpu.memory_space<vmem>>, vector<8x4xf32>
    %cst_118 = arith.constant dense<0.000000e+00> : vector<2x4xf32>
    %359 = tpu.matmul %357, %358, %cst_118 {dimension_numbers = #tpu.dot_dimension_numbers<[1], [0], [0], [1], [0, 0, 1, 1], [], []>} : vector<2x8xf32>, vector<8x4xf32>, vector<2x4xf32> -> vector<2x4xf32>
    %360 = arith.addf %321, %359 : vector<2x4xf32>
    %c0_119 = arith.constant 0 : index
    %c0_120 = arith.constant 0 : index
    %361 = vector.load %arg10[%c0_119, %c0_120] : memref<1x4xf32, #tpu.memory_space<vmem>>, vector<1x4xf32>
    %362 = vector.broadcast %361 : vector<1x4xf32> to vector<2x4xf32>
    %363 = arith.addf %360, %362 : vector<2x4xf32>
    %c0_121 = arith.constant 0 : index
    %c0_122 = arith.constant 0 : index
    %c0_123 = arith.constant 0 : index
    %364 = vector.load %arg11[%c0_121, %c0_122, %c0_123] : memref<1x2x4xf32, #tpu.memory_space<vmem>>, vector<1x2x4xf32>
    %365 = vector.shape_cast %364 : vector<1x2x4xf32> to vector<2x4xf32>
    %366 = vector.shape_cast %363 : vector<2x4xf32> to vector<1x2x4xf32>
    tpu.vector_store %arg11[%c0_121, %c0_122, %c0_123], %366 {strides = array<i32>} : memref<1x2x4xf32, #tpu.memory_space<vmem>>, vector<1x2x4xf32>,
    return
  }
  func.func @transform_0(%arg0: i32, %arg1: memref<6xi32, #tpu.memory_space<smem>>) -> (i32, i32, i32) {
    %c0_i32 = arith.constant 0 : i32
    %c0_i32_0 = arith.constant 0 : i32
    %c0_i32_1 = arith.constant 0 : i32
    return %arg0, %c0_i32, %c0_i32_0 : i32, i32, i32
  }
  func.func @transform_1(%arg0: i32, %arg1: memref<6xi32, #tpu.memory_space<smem>>) -> (i32, i32) {
    %c0_i32 = arith.constant 0 : i32
    %c0_i32_0 = arith.constant 0 : i32
    %c0_i32_1 = arith.constant 0 : i32
    return %c0_i32, %c0_i32_0 : i32, i32
  }
  func.func @transform_2(%arg0: i32, %arg1: memref<6xi32, #tpu.memory_space<smem>>) -> (i32, i32) {
    %c0_i32 = arith.constant 0 : i32
    %c0_i32_0 = arith.constant 0 : i32
    %c0_i32_1 = arith.constant 0 : i32
    return %c0_i32, %c0_i32_0 : i32, i32
  }
  func.func @transform_3(%arg0: i32, %arg1: memref<6xi32, #tpu.memory_space<smem>>) -> (i32, i32) {
    %c0_i32 = arith.constant 0 : i32
    %c0_i32_0 = arith.constant 0 : i32
    %c0_i32_1 = arith.constant 0 : i32
    return %c0_i32, %c0_i32_0 : i32, i32
  }
  func.func @transform_4(%arg0: i32, %arg1: memref<6xi32, #tpu.memory_space<smem>>) -> (i32, i32) {
    %c0_i32 = arith.constant 0 : i32
    %c0_i32_0 = arith.constant 0 : i32
    %c0_i32_1 = arith.constant 0 : i32
    return %c0_i32, %c0_i32_0 : i32, i32
  }
  func.func @transform_5(%arg0: i32, %arg1: memref<6xi32, #tpu.memory_space<smem>>) -> (i32, i32) {
    %c0_i32 = arith.constant 0 : i32
    %c0_i32_0 = arith.constant 0 : i32
    %c0_i32_1 = arith.constant 0 : i32
    return %c0_i32, %c0_i32_0 : i32, i32
  }
  func.func @transform_6(%arg0: i32, %arg1: memref<6xi32, #tpu.memory_space<smem>>) -> (i32, i32) {
    %c0_i32 = arith.constant 0 : i32
    %c0_i32_0 = arith.constant 0 : i32
    %c0_i32_1 = arith.constant 0 : i32
    return %c0_i32, %c0_i32_0 : i32, i32
  }
  func.func @transform_7(%arg0: i32, %arg1: memref<6xi32, #tpu.memory_space<smem>>) -> (i32, i32) {
    %c0_i32 = arith.constant 0 : i32
    %c0_i32_0 = arith.constant 0 : i32
    %c0_i32_1 = arith.constant 0 : i32
    return %c0_i32, %c0_i32_0 : i32, i32
  }
  func.func @transform_8(%arg0: i32, %arg1: memref<6xi32, #tpu.memory_space<smem>>) -> (i32, i32) {
    %c0_i32 = arith.constant 0 : i32
    %c0_i32_0 = arith.constant 0 : i32
    %c0_i32_1 = arith.constant 0 : i32
    return %c0_i32, %c0_i32_0 : i32, i32
  }
  func.func @transform_9(%arg0: i32, %arg1: memref<6xi32, #tpu.memory_space<smem>>) -> (i32, i32, i32) {
    %c0_i32 = arith.constant 0 : i32
    %c0_i32_0 = arith.constant 0 : i32
    %c0_i32_1 = arith.constant 0 : i32
    return %arg0, %c0_i32, %c0_i32_0 : i32, i32, i32
  }
}

</mosaic_0001>

<llo_original>
// kernel: tpu_custom_call.1
$region0: #{tpu_custom_call.1}
  #allocation0 [shape = 'u32[]', space=smem, size = 0x4, offset = 0x4, fixed_abs, tag = 'smem constant byte address 0x4 - core index']
  #allocation1 [shape = 'u32[72,128]{1,0:T(1,128)}', space=vmem, size = 0x9000, scoped, tag = 'internal scratch']
  #allocation2 [shape = 's32[1]{0}', space=sflag, size = 0x4, scoped, tag = 'scoped memory for tpu_custom_call.1']
  #allocation3 [shape = 'u8[512]{0}', space=smem, size = 0x200, scoped, tag = 'prefetched SMEM operand 0']
  %s0 = inlined_call_operand.vmem [shape: s32[6], index: 0, kind: input, shape index: {}]
  %s1 = inlined_call_operand.vmem [shape: bf16[2,16,64], index: 1, kind: input, shape index: {}]
  %s2 = inlined_call_operand.vmem [shape: bf16[64,64], index: 2, kind: input, shape index: {}]
  %s3 = inlined_call_operand.vmem [shape: bf16[64,64], index: 3, kind: input, shape index: {}]
  %s4 = inlined_call_operand.vmem [shape: bf16[64,64], index: 4, kind: input, shape index: {}]
  %s5 = inlined_call_operand.vmem [shape: f32[1,64], index: 5, kind: input, shape index: {}]
  %s6 = inlined_call_operand.vmem [shape: f32[64,1], index: 6, kind: input, shape index: {}]
  %s7 = inlined_call_operand.vmem [shape: f32[64,1], index: 7, kind: input, shape index: {}]
  %s8 = inlined_call_operand.vmem [shape: f32[64,4], index: 8, kind: input, shape index: {}]
  %s9 = inlined_call_operand.vmem [shape: f32[1,4], index: 9, kind: input, shape index: {}]
  %s10 = inlined_call_operand.hbm [shape: f32[2,2,4], index: 10, kind: output, shape index: {}]
  %s11 = sld [smem:[#allocation0]]
  $region69: #{tpu_custom_call.1} parent=0
    _
  %s13 = ssub.s32 1, %s11
  %s14 = scalar_select 0, %s13, %s11
  %s16 = sshll.u32 %s0, 4
  %s17 = int_to_ptr.vmem [resolvable:$true] %s16
  %19 = dma.vmem_to_smem %s17, 16, [#allocation3], [#allocation2]
  %21 = dma.done [#allocation2], 16
  %22 = sfence
  $region1: #{tpu_custom_call.1} parent=0
    #allocation4 [shape = 'u8[2048]{0}', space=vmem, size = 0x800, scoped, tag = 'output window, operand 0']
    #allocation5 [shape = 's32[2]{0}', space=sflag, size = 0x8, scoped, tag = 'scoped memory for tpu_custom_call.1']
    %23 = vsyncpa [#allocation5], 0
    %s24 = scalar_lea.sflag [#allocation5], 1
    %25 = vsyncpa %s24, 0
    loop: start=0, step=1, limit=4
    $region2: #{tpu_custom_call.1} parent=1 // loop_pre_header
      _
    $region3: #{tpu_custom_call.1} parent=1 // loop_header
      %s27 = sphi 0, %s31
      %p28 = scmp.ge.s32.totalorder %s27, 4
      %s37 = sphi 0, %s39
      %s40 = sphi 0, %s37
      %s41 = sphi 0, %s40
      %s57 = sphi 0, %s41
      %s61 = sphi 0, %s61
      %s63 = sphi 0, %s61
      %s64 = sphi 0, %s63
      %s78 = sphi 0, %s64
      %s82 = sphi 0, %s82
      %s84 = sphi 0, %s82
      %s85 = sphi 0, %s84
      %s99 = sphi 0, %s85
      %s103 = sphi 0, %s103
      %s105 = sphi 0, %s103
      %s106 = sphi 0, %s105
      %s120 = sphi 0, %s106
      %s124 = sphi 0, %s124
      %s126 = sphi 0, %s124
      %s127 = sphi 0, %s126
      %s141 = sphi 0, %s127
      %s145 = sphi 0, %s145
      %s147 = sphi 0, %s145
      %s148 = sphi 0, %s147
      %s162 = sphi 0, %s148
      %s166 = sphi 0, %s166
      %s168 = sphi 0, %s166
      %s169 = sphi 0, %s168
      %s183 = sphi 0, %s169
      %s187 = sphi 0, %s187
      %s189 = sphi 0, %s187
      %s190 = sphi 0, %s189
      %s204 = sphi 0, %s190
      %s208 = sphi 0, %s208
      %s210 = sphi 0, %s208
      %s211 = sphi 0, %s210
      %s225 = sphi 0, %s211
      %s231 = sphi 0, %s233
      %s234 = sphi 0, %s231
      %s235 = sphi 0, %s234
      %s251 = sphi 0, %s235
    $region4: #{tpu_custom_call.1} parent=1 // loop_header_branch
      %30 = sbr.rel (%p28) target = $region8
    $region5: #{tpu_custom_call.1} parent=1 // loop_body
      %s32 = ssub.s32 %s27, 1
      %s33 = ssub.s32 %s27, 2
      %s34 = sadd.s32 %s27, 1
      %s35 = ssub.s32 %s27, %s34
      %p36 = scmp.eq.s32.totalorder %s35, 0
      %s38 = sadd.s32 %s37, 1
      %s39 = scalar_select %p36, %s37, %s38
      %p42 = pneg %p36
      %p43 = scmp.eq.s32.totalorder %s27, 1
      %p44 = por %p42, %p43
      %p45 = scmp.ne.s32.totalorder %s37, %s40
      %p46 = scmp.eq.s32.totalorder %s27, 0
      %p47 = por %p45, %p46
      %p48 = scmp.ne.s32.totalorder %s37, %s40
      %p49 = scmp.eq.s32.totalorder %s32, 1
      %p50 = por %p48, %p49
      %p51 = scmp.ne.s32.totalorder %s40, %s41
      %p52 = scmp.eq.s32.totalorder %s32, 0
      %p53 = por %p51, %p52
      %p54 = scmp.ne.s32.totalorder %s40, %s41
      %p55 = scmp.eq.s32.totalorder %s33, 1
      %p56 = por %p54, %p55
      %p58 = scmp.ne.s32.totalorder %s41, %s57
      %p59 = scmp.eq.s32.totalorder %s33, 0
      %p60 = por %p58, %p59
      %s62 = sadd.s32 %s61, 1
      %p65 = scmp.eq.s32.totalorder %s27, 1
      %p66 = scmp.ne.s32.totalorder %s61, %s63
      %p67 = scmp.eq.s32.totalorder %s27, 0
      %p68 = por %p66, %p67
      %p69 = scmp.ne.s32.totalorder %s61, %s63
      %p70 = scmp.eq.s32.totalorder %s32, 1
      %p71 = por %p69, %p70
      %p72 = scmp.ne.s32.totalorder %s63, %s64
      %p73 = scmp.eq.s32.totalorder %s32, 0
      %p74 = por %p72, %p73
      %p75 = scmp.ne.s32.totalorder %s63, %s64
      %p76 = scmp.eq.s32.totalorder %s33, 1
      %p77 = por %p75, %p76
      %p79 = scmp.ne.s32.totalorder %s64, %s78
      %p80 = scmp.eq.s32.totalorder %s33, 0
      %p81 = por %p79, %p80
      %s83 = sadd.s32 %s82, 1
      %p86 = scmp.eq.s32.totalorder %s27, 1
      %p87 = scmp.ne.s32.totalorder %s82, %s84
      %p88 = scmp.eq.s32.totalorder %s27, 0
      %p89 = por %p87, %p88
      %p90 = scmp.ne.s32.totalorder %s82, %s84
      %p91 = scmp.eq.s32.totalorder %s32, 1
      %p92 = por %p90, %p91
      %p93 = scmp.ne.s32.totalorder %s84, %s85
      %p94 = scmp.eq.s32.totalorder %s32, 0
      %p95 = por %p93, %p94
      %p96 = scmp.ne.s32.totalorder %s84, %s85
      %p97 = scmp.eq.s32.totalorder %s33, 1
      %p98 = por %p96, %p97
      %p100 = scmp.ne.s32.totalorder %s85, %s99
      %p101 = scmp.eq.s32.totalorder %s33, 0
      %p102 = por %p100, %p101
      %s104 = sadd.s32 %s103, 1
      %p107 = scmp.eq.s32.totalorder %s27, 1
      %p108 = scmp.ne.s32.totalorder %s103, %s105
      %p109 = scmp.eq.s32.totalorder %s27, 0
      %p110 = por %p108, %p109
      %p111 = scmp.ne.s32.totalorder %s103, %s105
      %p112 = scmp.eq.s32.totalorder %s32, 1
      %p113 = por %p111, %p112
      %p114 = scmp.ne.s32.totalorder %s105, %s106
      %p115 = scmp.eq.s32.totalorder %s32, 0
      %p116 = por %p114, %p115
      %p117 = scmp.ne.s32.totalorder %s105, %s106
      %p118 = scmp.eq.s32.totalorder %s33, 1
      %p119 = por %p117, %p118
      %p121 = scmp.ne.s32.totalorder %s106, %s120
      %p122 = scmp.eq.s32.totalorder %s33, 0
      %p123 = por %p121, %p122
      %s125 = sadd.s32 %s124, 1
      %p128 = scmp.eq.s32.totalorder %s27, 1
      %p129 = scmp.ne.s32.totalorder %s124, %s126
      %p130 = scmp.eq.s32.totalorder %s27, 0
      %p131 = por %p129, %p130
      %p132 = scmp.ne.s32.totalorder %s124, %s126
      %p133 = scmp.eq.s32.totalorder %s32, 1
      %p134 = por %p132, %p133
      %p135 = scmp.ne.s32.totalorder %s126, %s127
      %p136 = scmp.eq.s32.totalorder %s32, 0
      %p137 = por %p135, %p136
      %p138 = scmp.ne.s32.totalorder %s126, %s127
      %p139 = scmp.eq.s32.totalorder %s33, 1
      %p140 = por %p138, %p139
      %p142 = scmp.ne.s32.totalorder %s127, %s141
      %p143 = scmp.eq.s32.totalorder %s33, 0
      %p144 = por %p142, %p143
      %s146 = sadd.s32 %s145, 1
      %p149 = scmp.eq.s32.totalorder %s27, 1
      %p150 = scmp.ne.s32.totalorder %s145, %s147
      %p151 = scmp.eq.s32.totalorder %s27, 0
      %p152 = por %p150, %p151
      %p153 = scmp.ne.s32.totalorder %s145, %s147
      %p154 = scmp.eq.s32.totalorder %s32, 1
      %p155 = por %p153, %p154
      %p156 = scmp.ne.s32.totalorder %s147, %s148
      %p157 = scmp.eq.s32.totalorder %s32, 0
      %p158 = por %p156, %p157
      %p159 = scmp.ne.s32.totalorder %s147, %s148
      %p160 = scmp.eq.s32.totalorder %s33, 1
      %p161 = por %p159, %p160
      %p163 = scmp.ne.s32.totalorder %s148, %s162
      %p164 = scmp.eq.s32.totalorder %s33, 0
      %p165 = por %p163, %p164
      %s167 = sadd.s32 %s166, 1
      %p170 = scmp.eq.s32.totalorder %s27, 1
      %p171 = scmp.ne.s32.totalorder %s166, %s168
      %p172 = scmp.eq.s32.totalorder %s27, 0
      %p173 = por %p171, %p172
      %p174 = scmp.ne.s32.totalorder %s166, %s168
      %p175 = scmp.eq.s32.totalorder %s32, 1
      %p176 = por %p174, %p175
      %p177 = scmp.ne.s32.totalorder %s168, %s169
      %p178 = scmp.eq.s32.totalorder %s32, 0
      %p179 = por %p177, %p178
      %p180 = scmp.ne.s32.totalorder %s168, %s169
      %p181 = scmp.eq.s32.totalorder %s33, 1
      %p182 = por %p180, %p181
      %p184 = scmp.ne.s32.totalorder %s169, %s183
      %p185 = scmp.eq.s32.totalorder %s33, 0
      %p186 = por %p184, %p185
      %s188 = sadd.s32 %s187, 1
      %p191 = scmp.eq.s32.totalorder %s27, 1
      %p192 = scmp.ne.s32.totalorder %s187, %s189
      %p193 = scmp.eq.s32.totalorder %s27, 0
      %p194 = por %p192, %p193
      %p195 = scmp.ne.s32.totalorder %s187, %s189
      %p196 = scmp.eq.s32.totalorder %s32, 1
      %p197 = por %p195, %p196
      %p198 = scmp.ne.s32.totalorder %s189, %s190
      %p199 = scmp.eq.s32.totalorder %s32, 0
      %p200 = por %p198, %p199
      %p201 = scmp.ne.s32.totalorder %s189, %s190
      %p202 = scmp.eq.s32.totalorder %s33, 1
      %p203 = por %p201, %p202
      %p205 = scmp.ne.s32.totalorder %s190, %s204
      %p206 = scmp.eq.s32.totalorder %s33, 0
      %p207 = por %p205, %p206
      %s209 = sadd.s32 %s208, 1
      %p212 = scmp.eq.s32.totalorder %s27, 1
      %p213 = scmp.ne.s32.totalorder %s208, %s210
      %p214 = scmp.eq.s32.totalorder %s27, 0
      %p215 = por %p213, %p214
      %p216 = scmp.ne.s32.totalorder %s208, %s210
      %p217 = scmp.eq.s32.totalorder %s32, 1
      %p218 = por %p216, %p217
      %p219 = scmp.ne.s32.totalorder %s210, %s211
      %p220 = scmp.eq.s32.totalorder %s32, 0
      %p221 = por %p219, %p220
      %p222 = scmp.ne.s32.totalorder %s210, %s211
      %p223 = scmp.eq.s32.totalorder %s33, 1
      %p224 = por %p222, %p223
      %p226 = scmp.ne.s32.totalorder %s211, %s225
      %p227 = scmp.eq.s32.totalorder %s33, 0
      %p228 = por %p226, %p227
      %s229 = ssub.s32 %s27, %s34
      %p230 = scmp.eq.s32.totalorder %s229, 0
      %s232 = sadd.s32 %s231, 1
      %s233 = scalar_select %p230, %s231, %s232
      %p236 = pneg %p230
      %p237 = scmp.eq.s32.totalorder %s27, 1
      %p238 = por %p236, %p237
      %p239 = scmp.ne.s32.totalorder %s231, %s234
      %p240 = scmp.eq.s32.totalorder %s27, 0
      %p241 = por %p239, %p240
      %p242 = scmp.ne.s32.totalorder %s231, %s234
      %p243 = scmp.eq.s32.totalorder %s32, 1
      %p244 = por %p242, %p243
      %p245 = scmp.ne.s32.totalorder %s234, %s235
      %p246 = scmp.eq.s32.totalorder %s32, 0
      %p247 = por %p245, %p246
      %p248 = scmp.ne.s32.totalorder %s234, %s235
      %p249 = scmp.eq.s32.totalorder %s33, 1
      %p250 = por %p248, %p249
      %p252 = scmp.ne.s32.totalorder %s235, %s251
      %p253 = scmp.eq.s32.totalorder %s33, 0
      %p254 = por %p252, %p253
      %p255 = scmp.le.s32.totalorder 1, %s27
      %p256 = scmp.lt.s32.totalorder %s27, 3
      %p257 = pnand %p255, %p256
      %p258 = pneg %p257
      // Predicated region
      $region9: #{tpu_custom_call.1} parent=5 // pred_check
        _
      $region10: #{tpu_custom_call.1} parent=5 // pred_check_branch
        %260 = sbr.rel (%p257) target = $region12
      $region11: #{tpu_custom_call.1} parent=5 // pred_region
        %s261 = ssub.s32 %s27, 1
        // Predicated region
        $region13: #{tpu_custom_call.1} parent=11 // pred_check
          %p262 = pneg %p74
        $region14: #{tpu_custom_call.1} parent=11 // pred_check_branch
          %264 = sbr.rel (%p262) target = $region16
        $region15: #{tpu_custom_call.1} parent=11 // pred_region
          _
        $region16: #{tpu_custom_call.1} parent=11 // pred_fallthru
          _
        // Predicated region
        $region17: #{tpu_custom_call.1} parent=11 // pred_check
          %p265 = pneg %p95
        $region18: #{tpu_custom_call.1} parent=11 // pred_check_branch
          %267 = sbr.rel (%p265) target = $region20
        $region19: #{tpu_custom_call.1} parent=11 // pred_region
          _
        $region20: #{tpu_custom_call.1} parent=11 // pred_fallthru
          _
        // Predicated region
        $region21: #{tpu_custom_call.1} parent=11 // pred_check
          %p268 = pneg %p116
        $region22: #{tpu_custom_call.1} parent=11 // pred_check_branch
          %270 = sbr.rel (%p268) target = $region24
        $region23: #{tpu_custom_call.1} parent=11 // pred_region
          _
        $region24: #{tpu_custom_call.1} parent=11 // pred_fallthru
          _
        // Predicated region
        $region25: #{tpu_custom_call.1} parent=11 // pred_check
          %p271 = pneg %p137
        $region26: #{tpu_custom_call.1} parent=11 // pred_check_branch
          %273 = sbr.rel (%p271) target = $region28
        $region27: #{tpu_custom_call.1} parent=11 // pred_region
          _
        $region28: #{tpu_custom_call.1} parent=11 // pred_fallthru
          _
        // Predicated region
        $region29: #{tpu_custom_call.1} parent=11 // pred_check
          %p274 = pneg %p158
        $region30: #{tpu_custom_call.1} parent=11 // pred_check_branch
          %276 = sbr.rel (%p274) target = $region32
        $region31: #{tpu_custom_call.1} parent=11 // pred_region
          _
        $region32: #{tpu_custom_call.1} parent=11 // pred_fallthru
          _
        // Predicated region
        $region33: #{tpu_custom_call.1} parent=11 // pred_check
          %p277 = pneg %p179
        $region34: #{tpu_custom_call.1} parent=11 // pred_check_branch
          %279 = sbr.rel (%p277) target = $region36
        $region35: #{tpu_custom_call.1} parent=11 // pred_region
          _
        $region36: #{tpu_custom_call.1} parent=11 // pred_fallthru
          _
        // Predicated region
        $region37: #{tpu_custom_call.1} parent=11 // pred_check
          %p280 = pneg %p200
        $region38: #{tpu_custom_call.1} parent=11 // pred_check_branch
          %282 = sbr.rel (%p280) target = $region40
        $region39: #{tpu_custom_call.1} parent=11 // pred_region
          _
        $region40: #{tpu_custom_call.1} parent=11 // pred_fallthru
          _
        // Predicated region
        $region41: #{tpu_custom_call.1} parent=11 // pred_check
          %p283 = pneg %p221
        $region42: #{tpu_custom_call.1} parent=11 // pred_check_branch
          %285 = sbr.rel (%p283) target = $region44
        $region43: #{tpu_custom_call.1} parent=11 // pred_region
          _
        $region44: #{tpu_custom_call.1} parent=11 // pred_fallthru
          _
      $region12: #{tpu_custom_call.1} parent=5 // pred_fallthru
        _
      %p286 = scmp.lt.s32.totalorder %s27, 2
      // Predicated region
      $region45: #{tpu_custom_call.1} parent=5 // pred_check
        %p287 = pneg %p286
      $region46: #{tpu_custom_call.1} parent=5 // pred_check_branch
        %289 = sbr.rel (%p287) target = $region48
      $region47: #{tpu_custom_call.1} parent=5 // pred_region
        // Predicated region
        $region49: #{tpu_custom_call.1} parent=47 // pred_check
          %p290 = pneg %p47
        $region50: #{tpu_custom_call.1} parent=47 // pred_check_branch
          %292 = sbr.rel (%p290) target = $region52
        $region51: #{tpu_custom_call.1} parent=47 // pred_region
          %p293 = scmp.lt.s32.totalorder %s27, 1
          %s294 = scalar_select %p293, %s27, 1
          %s295 = smul.addr %s294, 2
          %s296 = smul.addr %s295, 4
          %s297 = scalar_lea.vmem %s1, %s296
        $region52: #{tpu_custom_call.1} parent=47 // pred_fallthru
          _
      $region48: #{tpu_custom_call.1} parent=5 // pred_fallthru
        _
      %p298 = scmp.le.s32.totalorder 1, %s27
      %p299 = scmp.lt.s32.totalorder %s27, 3
      %p300 = pnand %p298, %p299
      %p301 = pneg %p300
      // Predicated region
      $region53: #{tpu_custom_call.1} parent=5 // pred_check
        _
      $region54: #{tpu_custom_call.1} parent=5 // pred_check_branch
        %303 = sbr.rel (%p300) target = $region56
      $region55: #{tpu_custom_call.1} parent=5 // pred_region
        %s304 = ssub.s32 %s27, 1
        %p305 = scmp.lt.s32.totalorder %s32, 1
        %s306 = scalar_select %p305, %s32, 1
        %s307 = smul.addr %s306, 2
        %s308 = smul.addr %s307, 4
        %s309 = scalar_lea.vmem %s1, %s308
        %p310 = pneg %p53
        %p311 = pneg %p50
        %p312 = pneg %p74
        %p313 = pneg %p71
        %p314 = pneg %p95
        %p315 = pneg %p92
        %p316 = pneg %p116
        %p317 = pneg %p113
        %p318 = pneg %p137
        %p319 = pneg %p134
        %p320 = pneg %p158
        %p321 = pneg %p155
        %p322 = pneg %p179
        %p323 = pneg %p176
        %p324 = pneg %p200
        %p325 = pneg %p197
        %p326 = pneg %p221
        %p327 = pneg %p218
        %p328 = pneg %p247
        %p329 = pneg %p244
        %s330 = sand.u32 %s234, 1
        %s331 = scalar_lea.sflag [#allocation5], %s330
        %s332 = sand.u32 %s234, 1
        %s333 = smul.addr %s332, 2
        %s334 = scalar_lea.vmem [#allocation4], %s333
        %p335 = scmp.lt.s32.totalorder %s32, 1
        %s336 = scalar_select %p335, %s32, 1
        %s337 = smul.addr %s336, 2
        %s338 = smul.addr %s337, 4
        %s339 = scalar_lea.vmem %s1, %s338
        %s341 = smul.u32 %s32, 3
        %s342 = sld [smem:[#allocation3 + %s341]]
        %s343 = sadd.s32 %s341, 1
        %s344 = sld [smem:[#allocation3 + %s343]]
        %s345 = sadd.s32 %s341, 2
        %s346 = sld [smem:[#allocation3 + %s345]]
        %v347 = vld [vmem:[%s339] sm:$0xf]
        %v348 = vld [vmem:[%s339 + $0x4] sm:$0xf]
        %v349 = vld [vmem:[%s2] sm:$0xf]
        %v350 = vld [vmem:[%s2 + $0x4] sm:$0xf]
        %v351 = vld [vmem:[%s2 + $0x8] sm:$0xf]
        %v352 = vld [vmem:[%s2 + $0xc] sm:$0xf]
        %v353 = vld [vmem:[%s2 + $0x10] sm:$0xf]
        %v354 = vld [vmem:[%s2 + $0x14] sm:$0xf]
        %v355 = vld [vmem:[%s2 + $0x18] sm:$0xf]
        %v356 = vld [vmem:[%s2 + $0x1c] sm:$0xf]
        %v357 = vld [vmem:[%s5] sm:$0x1]
        %v359 = vperm.slane %v357, 0
        %v363 = vunpack.c.l.b16 %v347
        %v364 = vunpack.c.l.b16 %v348
        %v365 = vpack.c.b16 %v364, %v363
        %v374 = vunpack.c.l.b16 %v349
        %v375 = vunpack.c.l.b16 %v350
        %v376 = vunpack.c.l.b16 %v351
        %v377 = vunpack.c.l.b16 %v352
        %v378 = vunpack.c.l.b16 %v353
        %v379 = vunpack.c.l.b16 %v354
        %v380 = vunpack.c.l.b16 %v355
        %v381 = vunpack.c.l.b16 %v356
        %v382 = vpack.c.b16 %v375, %v374
        %v383 = vpack.c.b16 %v377, %v376
        %v384 = vpack.c.b16 %v379, %v378
        %v385 = vpack.c.b16 %v381, %v380
        %vm390 = vcmask 523264
        %v392 = vsel %vm390, %v365, 0
        %394 = vmatpush.bf16.msra.mxu0 0
        %395 = vmatpush.bf16.msra.mxu0 0
        %396 = vmatpush.bf16.msra.mxu0 0
        %397 = vmatpush.bf16.msra.mxu0 0
        %398 = vmatpush.bf16.msra.mxu0 %v385
        %399 = vmatpush.bf16.msra.mxu0 %v384
        %400 = vmatpush.bf16.msra.mxu0 %v383
        %401 = vmatpush.bf16.msra.mxu0 %v382
        %402 = vmatmul.bf16.gmra.mxu0 %v392
        %v403 = vpop.f32.mrf.mxu0
        %v404 = vadd.f32 %v359, %v403
        %v405 = vpop.f32.mrf.mxu0
        %v406 = vadd.f32 %v359, %v405
        %407 = vdwg.mxu0
        %v408 = vld [vmem:[%s3] sm:$0xf]
        %v409 = vld [vmem:[%s3 + $0x4] sm:$0xf]
        %v410 = vld [vmem:[%s3 + $0x8] sm:$0xf]
        %v411 = vld [vmem:[%s3 + $0xc] sm:$0xf]
        %v412 = vld [vmem:[%s3 + $0x10] sm:$0xf]
        %v413 = vld [vmem:[%s3 + $0x14] sm:$0xf]
        %v414 = vld [vmem:[%s3 + $0x18] sm:$0xf]
        %v415 = vld [vmem:[%s3 + $0x1c] sm:$0xf]
        %v416 = vld [vmem:[%s6] sm:$0xff]
        %v417 = vld [vmem:[%s6 + $0x8] sm:$0xff]
        %v418 = vld [vmem:[%s6 + $0x10] sm:$0xff]
        %v419 = vld [vmem:[%s6 + $0x18] sm:$0xff]
        %v420 = vld [vmem:[%s6 + $0x20] sm:$0xff]
        %v421 = vld [vmem:[%s6 + $0x28] sm:$0xff]
        %v422 = vld [vmem:[%s6 + $0x30] sm:$0xff]
        %v423 = vld [vmem:[%s6 + $0x38] sm:$0xff]
        %425 = vset.pattern.permute.xlu0 0
        %426 = vperm.xlu0 %425, %v416
        %v427 = vpop.permute.xlu0 %426
        %430 = vset.pattern.permute.xlu0 0
        %431 = vperm.xlu0 %430, %v417
        %v432 = vpop.permute.xlu0 %431
        %435 = vset.pattern.permute.xlu0 0
        %436 = vperm.xlu0 %435, %v418
        %v437 = vpop.permute.xlu0 %436
        %440 = vset.pattern.permute.xlu0 0
        %441 = vperm.xlu0 %440, %v419
        %v442 = vpop.permute.xlu0 %441
        %445 = vset.pattern.permute.xlu0 0
        %446 = vperm.xlu0 %445, %v420
        %v447 = vpop.permute.xlu0 %446
        %450 = vset.pattern.permute.xlu0 0
        %451 = vperm.xlu0 %450, %v421
        %v452 = vpop.permute.xlu0 %451
        %455 = vset.pattern.permute.xlu0 0
        %456 = vperm.xlu0 %455, %v422
        %v457 = vpop.permute.xlu0 %456
        %460 = vset.pattern.permute.xlu0 0
        %461 = vperm.xlu0 %460, %v423
        %v462 = vpop.permute.xlu0 %461
        %v472 = vunpack.c.l.b16 %v408
        %v473 = vunpack.c.l.b16 %v409
        %v474 = vunpack.c.l.b16 %v410
        %v475 = vunpack.c.l.b16 %v411
        %v476 = vunpack.c.l.b16 %v412
        %v477 = vunpack.c.l.b16 %v413
        %v478 = vunpack.c.l.b16 %v414
        %v479 = vunpack.c.l.b16 %v415
        %v480 = vpack.c.b16 %v473, %v472
        %v481 = vpack.c.b16 %v475, %v474
        %v482 = vpack.c.b16 %v477, %v476
        %v483 = vpack.c.b16 %v479, %v478
        %v485 = vsel %vm390, %v480, 0
        %v488 = vsel %vm390, %v481, 0
        %v491 = vsel %vm390, %v482, 0
        %v494 = vsel %vm390, %v483, 0
        %496 = vmatpush.bf16.xpose.msra.mxu0 0
        %497 = vmatpush.bf16.xpose.msra.mxu0 0
        %498 = vmatpush.bf16.xpose.msra.mxu0 0
        %499 = vmatpush.bf16.xpose.msra.mxu0 0
        %500 = vmatpush.bf16.xpose.msra.mxu0 0
        %501 = vmatpush.bf16.xpose.msra.mxu0 0
        %502 = vmatpush.bf16.xpose.msra.mxu0 0
        %503 = vmatpush.bf16.xpose.msra.mxu0 %v392
        %504 = vmatmul.bf16.gmra.mxu0 %v485
        %v505 = vpop.f32.mrf.mxu0
        %v506 = vadd.f32 %v427, %v505
        %v507 = vpop.f32.mrf.mxu0
        %v508 = vadd.f32 %v432, %v507
        %509 = vmatmul.bf16.gmra.mxu0 %v488
        %v510 = vpop.f32.mrf.mxu0
        %v511 = vadd.f32 %v437, %v510
        %v512 = vpop.f32.mrf.mxu0
        %v513 = vadd.f32 %v442, %v512
        %514 = vmatmul.bf16.gmra.mxu0 %v491
        %v515 = vpop.f32.mrf.mxu0
        %v516 = vadd.f32 %v447, %v515
        %v517 = vpop.f32.mrf.mxu0
        %v518 = vadd.f32 %v452, %v517
        %519 = vmatmul.bf16.gmra.mxu0 %v494
        %v520 = vpop.f32.mrf.mxu0
        %v521 = vadd.f32 %v457, %v520
        %v522 = vpop.f32.mrf.mxu0
        %v523 = vadd.f32 %v462, %v522
        %524 = vdwg.mxu0
        %v525 = vld [vmem:[%s4] sm:$0xf]
        %v526 = vld [vmem:[%s4 + $0x4] sm:$0xf]
        %v527 = vld [vmem:[%s4 + $0x8] sm:$0xf]
        %v528 = vld [vmem:[%s4 + $0xc] sm:$0xf]
        %v529 = vld [vmem:[%s4 + $0x10] sm:$0xf]
        %v530 = vld [vmem:[%s4 + $0x14] sm:$0xf]
        %v531 = vld [vmem:[%s4 + $0x18] sm:$0xf]
        %v532 = vld [vmem:[%s4 + $0x1c] sm:$0xf]
        %v533 = vld [vmem:[%s7] sm:$0xff]
        %v534 = vld [vmem:[%s7 + $0x8] sm:$0xff]
        %v535 = vld [vmem:[%s7 + $0x10] sm:$0xff]
        %v536 = vld [vmem:[%s7 + $0x18] sm:$0xff]
        %v537 = vld [vmem:[%s7 + $0x20] sm:$0xff]
        %v538 = vld [vmem:[%s7 + $0x28] sm:$0xff]
        %v539 = vld [vmem:[%s7 + $0x30] sm:$0xff]
        %v540 = vld [vmem:[%s7 + $0x38] sm:$0xff]
        %542 = vset.pattern.permute.xlu0 0
        %543 = vperm.xlu0 %542, %v533
        %v544 = vpop.permute.xlu0 %543
        %547 = vset.pattern.permute.xlu0 0
        %548 = vperm.xlu0 %547, %v534
        %v549 = vpop.permute.xlu0 %548
        %552 = vset.pattern.permute.xlu0 0
        %553 = vperm.xlu0 %552, %v535
        %v554 = vpop.permute.xlu0 %553
        %557 = vset.pattern.permute.xlu0 0
        %558 = vperm.xlu0 %557, %v536
        %v559 = vpop.permute.xlu0 %558
        %562 = vset.pattern.permute.xlu0 0
        %563 = vperm.xlu0 %562, %v537
        %v564 = vpop.permute.xlu0 %563
        %567 = vset.pattern.permute.xlu0 0
        %568 = vperm.xlu0 %567, %v538
        %v569 = vpop.permute.xlu0 %568
        %572 = vset.pattern.permute.xlu0 0
        %573 = vperm.xlu0 %572, %v539
        %v574 = vpop.permute.xlu0 %573
        %577 = vset.pattern.permute.xlu0 0
        %578 = vperm.xlu0 %577, %v540
        %v579 = vpop.permute.xlu0 %578
        %v589 = vunpack.c.l.b16 %v525
        %v590 = vunpack.c.l.b16 %v526
        %v591 = vunpack.c.l.b16 %v527
        %v592 = vunpack.c.l.b16 %v528
        %v593 = vunpack.c.l.b16 %v529
        %v594 = vunpack.c.l.b16 %v530
        %v595 = vunpack.c.l.b16 %v531
        %v596 = vunpack.c.l.b16 %v532
        %v597 = vpack.c.b16 %v590, %v589
        %v598 = vpack.c.b16 %v592, %v591
        %v599 = vpack.c.b16 %v594, %v593
        %v600 = vpack.c.b16 %v596, %v595
        %v602 = vsel %vm390, %v597, 0
        %v605 = vsel %vm390, %v598, 0
        %v608 = vsel %vm390, %v599, 0
        %v611 = vsel %vm390, %v600, 0
        %613 = vmatpush.bf16.xpose.msra.mxu0 0
        %614 = vmatpush.bf16.xpose.msra.mxu0 0
        %615 = vmatpush.bf16.xpose.msra.mxu0 0
        %616 = vmatpush.bf16.xpose.msra.mxu0 0
        %617 = vmatpush.bf16.xpose.msra.mxu0 0
        %618 = vmatpush.bf16.xpose.msra.mxu0 0
        %619 = vmatpush.bf16.xpose.msra.mxu0 0
        %620 = vmatpush.bf16.xpose.msra.mxu0 %v392
        %621 = vmatmul.bf16.gmra.mxu0 %v602
        %v622 = vpop.f32.mrf.mxu0
        %v623 = vadd.f32 %v544, %v622
        %v624 = vpop.f32.mrf.mxu0
        %v625 = vadd.f32 %v549, %v624
        %626 = vmatmul.bf16.gmra.mxu0 %v605
        %v627 = vpop.f32.mrf.mxu0
        %v628 = vadd.f32 %v554, %v627
        %v629 = vpop.f32.mrf.mxu0
        %v630 = vadd.f32 %v559, %v629
        %631 = vmatmul.bf16.gmra.mxu0 %v608
        %v632 = vpop.f32.mrf.mxu0
        %v633 = vadd.f32 %v564, %v632
        %v634 = vpop.f32.mrf.mxu0
        %v635 = vadd.f32 %v569, %v634
        %636 = vmatmul.bf16.gmra.mxu0 %v611
        %v637 = vpop.f32.mrf.mxu0
        %v638 = vadd.f32 %v574, %v637
        %v639 = vpop.f32.mrf.mxu0
        %v640 = vadd.f32 %v579, %v639
        %641 = vdwg.mxu0
        %v642 = vlaneseq
        %v643 = vand.u32 %v642, 127
        %s644 = ssub.s32 %s344, %s342
        %s645 = scvt.s32.f32 %s644
        %s646 = smax.f32 %s645, 1.0
        %v647 = vstv %s342
        %vm648 = vcmp.ge.s32.totalorder %v643, %v647
        %v649 = vstv %s344
        %vm650 = vcmp.lt.s32.totalorder %v643, %v649
        %vm651 = vmand %vm648, %vm650
        %v652 = vstv %s646
        %v653 = vrcp.pop %v652
        %v654 = vmul.f32 %v652, %v653
        %v655 = vsub.f32 1.0, %v654
        %v656 = vmul.f32 %v653, %v655
        %v657 = vadd.f32 %v653, %v656
        %vm658 = vweird.f32 %v652
        %vm659 = vweird.f32 %v653
        %vm660 = vmor %vm658, %vm659
        %v661 = vsel %vm660, %v653, %v657
        %v662 = vand.u32 2147483647, %v652
        %vm663 = vcmp.eq.f32.partialorder %v662, 8.507059e+37
        %v664 = vand.u32 %v652, 2147483648
        %v665 = vor.u32 1.1754944e-38, %v664
        %v666 = vsel %vm663, %v665, %v661
        %s667 = vtos %v666
        %v668 = vstv %s667
        %v669 = vsel %vm651, %v668, 0.0
        %vm670 = vcmp.ge.s32.totalorder %v643, %v649
        %v671 = vstv %s346
        %vm672 = vcmp.lt.s32.totalorder %v643, %v671
        %vm673 = vmand %vm670, %vm672
        %vm674 = vcmp.ge.s32.totalorder %v643, %v671
        %vm675 = vcmask 64512
        %v677 = vsel %vm675, %v404, 0
        %v680 = vsel %vm675, %v406, 0
        %682 = vmatpush.msra.mxu0 0.0
        %683 = vmatpush.msra.mxu0 0.0
        %684 = vmatpush.msra.mxu0 0.0
        %685 = vmatpush.msra.mxu0 0.0
        %686 = vmatpush.msra.mxu0 0.0
        %687 = vmatpush.msra.mxu0 0.0
        %688 = vmatpush.msra.mxu0 0.0
        %689 = vmatpush.msra.mxu0 0.0
        %690 = vmatpush.msra.mxu0 0.0
        %691 = vmatpush.msra.mxu0 0.0
        %692 = vmatpush.msra.mxu0 0.0
        %693 = vmatpush.msra.mxu0 0.0
        %694 = vmatpush.msra.mxu0 0.0
        %695 = vmatpush.msra.mxu0 0.0
        %696 = vmatpush.msra.mxu0 0.0
        %697 = vmatpush.msra.mxu0 %v506
        %698 = vmatmul.f32.gmra.mxu0 %v677
        %v699 = vpop.f32.mrf.mxu0
        %v700 = vadd.f32 0.0, %v699
        %701 = vmatmul.f32.gmra.mxu0 %v680
        %v702 = vpop.f32.mrf.mxu0
        %v703 = vadd.f32 0.0, %v702
        %704 = vdwg.mxu0
        %v705 = vsel %vm673, 1, 0
        %vm706 = vcmp.eq.s32.totalorder %v705, 1
        %v707 = vsel %vm706, %v700, -1e+30
        %v708 = vsel %vm706, %v703, -1e+30
        %vm709 = vcmask 130048
        %v710 = vsel %vm709, %v707, -inf
        %711 = vmax.xlane.f32.xlu0 %v710
        %v712 = vpop.xlane.xlu0 %711
        %v713 = vsel %vm709, %v708, -inf
        %714 = vmax.xlane.f32.xlu0 %v713
        %v715 = vpop.xlane.xlu0 %714
        %v716 = vsub.f32 %v707, %v712
        %v717 = vsub.f32 %v708, %v715
        %v718 = vmul.f32 %v716, 1.442695
        %v719 = vpow.pop %v718
        %v720 = vmul.f32 %v717, 1.442695
        %v721 = vpow.pop %v720
        %v722 = vsel %vm709, %v719, 0.0
        %723 = vadd.xlane.f32.xlu0 %v722
        %v724 = vpop.xlane.xlu0 %723
        %v725 = vsel %vm709, %v721, 0.0
        %726 = vadd.xlane.f32.xlu0 %v725
        %v727 = vpop.xlane.xlu0 %726
        %v728 = vrcp.pop %v724
        %v729 = vrcp.pop %v727
        %v730 = vmul.f32 %v719, %v728
        %v731 = vmul.f32 %v721, %v729
        %v733 = vsel %vm709, %v669, 0
        %735 = vmatpush.msra.mxu0 0.0
        %736 = vmatpush.msra.mxu0 0.0
        %737 = vmatpush.msra.mxu0 0.0
        %738 = vmatpush.msra.mxu0 0.0
        %739 = vmatpush.msra.mxu0 0.0
        %740 = vmatpush.msra.mxu0 0.0
        %741 = vmatpush.msra.mxu0 0.0
        %742 = vmatpush.msra.mxu0 0.0
        %743 = vmatpush.msra.mxu0 0.0
        %744 = vmatpush.msra.mxu0 0.0
        %745 = vmatpush.msra.mxu0 0.0
        %746 = vmatpush.msra.mxu0 0.0
        %747 = vmatpush.msra.mxu0 0.0
        %748 = vmatpush.msra.mxu0 0.0
        %749 = vmatpush.msra.mxu0 %v731
        %750 = vmatpush.msra.mxu0 %v730
        %751 = vmatmul.f32.gmra.mxu0 %v733
        %v752 = vpop.f32.mrf.mxu0
        %v753 = vadd.f32 0.0, %v752
        %754 = vdwg.mxu0
        %v755 = vsel %vm674, 1, 0
        %vm756 = vcmp.eq.s32.totalorder %v755, 1
        %v757 = vsel %vm756, %v700, -1e+30
        %v758 = vsel %vm756, %v703, -1e+30
        %v759 = vsel %vm709, %v757, -inf
        %760 = vmax.xlane.f32.xlu0 %v759
        %v761 = vpop.xlane.xlu0 %760
        %v762 = vsel %vm709, %v758, -inf
        %763 = vmax.xlane.f32.xlu0 %v762
        %v764 = vpop.xlane.xlu0 %763
        %v765 = vsub.f32 %v757, %v761
        %v766 = vsub.f32 %v758, %v764
        %v767 = vmul.f32 %v765, 1.442695
        %v768 = vpow.pop %v767
        %v769 = vmul.f32 %v766, 1.442695
        %v770 = vpow.pop %v769
        %v771 = vsel %vm709, %v768, 0.0
        %772 = vadd.xlane.f32.xlu0 %v771
        %v773 = vpop.xlane.xlu0 %772
        %v774 = vsel %vm709, %v770, 0.0
        %775 = vadd.xlane.f32.xlu0 %v774
        %v776 = vpop.xlane.xlu0 %775
        %v777 = vrcp.pop %v773
        %v778 = vrcp.pop %v776
        %v779 = vmul.f32 %v768, %v777
        %v780 = vmul.f32 %v770, %v778
        %781 = vmatpush.msra.mxu0 0.0
        %782 = vmatpush.msra.mxu0 0.0
        %783 = vmatpush.msra.mxu0 0.0
        %784 = vmatpush.msra.mxu0 0.0
        %785 = vmatpush.msra.mxu0 0.0
        %786 = vmatpush.msra.mxu0 0.0
        %787 = vmatpush.msra.mxu0 0.0
        %788 = vmatpush.msra.mxu0 0.0
        %789 = vmatpush.msra.mxu0 0.0
        %790 = vmatpush.msra.mxu0 0.0
        %791 = vmatpush.msra.mxu0 0.0
        %792 = vmatpush.msra.mxu0 0.0
        %793 = vmatpush.msra.mxu0 0.0
        %794 = vmatpush.msra.mxu0 0.0
        %795 = vmatpush.msra.mxu0 %v780
        %796 = vmatpush.msra.mxu0 %v779
        %797 = vmatmul.f32.gmra.mxu0 %v733
        %v798 = vpop.f32.mrf.mxu0
        %v799 = vadd.f32 0.0, %v798
        %800 = vdwg.mxu0
        %v802 = vrot.slane %v799, 7
        %vm804 = vcmask 1040384
        %v805 = vsel %vm804, %v753, %v802
        %v807 = vsel %vm709, %v805, 0
        %v810 = vsel %vm709, %v623, 0
        %812 = vmatpush.xpose.msra.mxu0 0.0
        %813 = vmatpush.xpose.msra.mxu0 0.0
        %814 = vmatpush.xpose.msra.mxu0 0.0
        %815 = vmatpush.xpose.msra.mxu0 0.0
        %816 = vmatpush.xpose.msra.mxu0 0.0
        %817 = vmatpush.xpose.msra.mxu0 0.0
        %818 = vmatpush.xpose.msra.mxu0 0.0
        %819 = vmatpush.xpose.msra.mxu0 0.0
        %820 = vmatpush.xpose.msra.mxu0 0.0
        %821 = vmatpush.xpose.msra.mxu0 0.0
        %822 = vmatpush.xpose.msra.mxu0 0.0
        %823 = vmatpush.xpose.msra.mxu0 0.0
        %824 = vmatpush.xpose.msra.mxu0 0.0
        %825 = vmatpush.xpose.msra.mxu0 0.0
        %826 = vmatpush.xpose.msra.mxu0 0.0
        %827 = vmatpush.xpose.msra.mxu0 %v810
        %828 = vmatmul.f32.gmra.mxu0 %v807
        %v829 = vpop.f32.mrf.mxu0
        %v830 = vadd.f32 0.0, %v829
        %831 = vdwg.mxu0
        %v832 = vld [vmem:[%s8] sm:$0xff]
        %833 = vrot.lane.b32.xlu0 %v404, 120
        %v834 = vpop.permute.xlu0 %833
        %835 = vrot.lane.b32.xlu0 %v406, 120
        %v836 = vpop.permute.xlu0 %835
        %v837 = vsel %vm675, %v834, 0
        %v839 = vsel %vm675, %v836, 0
        %841 = vmatpush.msra.mxu0 0.0
        %842 = vmatpush.msra.mxu0 0.0
        %843 = vmatpush.msra.mxu0 0.0
        %844 = vmatpush.msra.mxu0 0.0
        %845 = vmatpush.msra.mxu0 0.0
        %846 = vmatpush.msra.mxu0 0.0
        %847 = vmatpush.msra.mxu0 0.0
        %848 = vmatpush.msra.mxu0 0.0
        %849 = vmatpush.msra.mxu0 0.0
        %850 = vmatpush.msra.mxu0 0.0
        %851 = vmatpush.msra.mxu0 0.0
        %852 = vmatpush.msra.mxu0 0.0
        %853 = vmatpush.msra.mxu0 0.0
        %854 = vmatpush.msra.mxu0 0.0
        %855 = vmatpush.msra.mxu0 0.0
        %856 = vmatpush.msra.mxu0 %v508
        %857 = vmatmul.f32.gmra.mxu0 %v837
        %v858 = vpop.f32.mrf.mxu0
        %v859 = vadd.f32 0.0, %v858
        %860 = vmatmul.f32.gmra.mxu0 %v839
        %v861 = vpop.f32.mrf.mxu0
        %v862 = vadd.f32 0.0, %v861
        %863 = vdwg.mxu0
        %v864 = vsel %vm706, %v859, -1e+30
        %v865 = vsel %vm706, %v862, -1e+30
        %v866 = vsel %vm709, %v864, -inf
        %867 = vmax.xlane.f32.xlu0 %v866
        %v868 = vpop.xlane.xlu0 %867
        %v869 = vsel %vm709, %v865, -inf
        %870 = vmax.xlane.f32.xlu0 %v869
        %v871 = vpop.xlane.xlu0 %870
        %v872 = vsub.f32 %v864, %v868
        %v873 = vsub.f32 %v865, %v871
        %v874 = vmul.f32 %v872, 1.442695
        %v875 = vpow.pop %v874
        %v876 = vmul.f32 %v873, 1.442695
        %v877 = vpow.pop %v876
        %v878 = vsel %vm709, %v875, 0.0
        %879 = vadd.xlane.f32.xlu0 %v878
        %v880 = vpop.xlane.xlu0 %879
        %v881 = vsel %vm709, %v877, 0.0
        %882 = vadd.xlane.f32.xlu0 %v881
        %v883 = vpop.xlane.xlu0 %882
        %v884 = vrcp.pop %v880
        %v885 = vrcp.pop %v883
        %v886 = vmul.f32 %v875, %v884
        %v887 = vmul.f32 %v877, %v885
        %888 = vmatpush.msra.mxu0 0.0
        %889 = vmatpush.msra.mxu0 0.0
        %890 = vmatpush.msra.mxu0 0.0
        %891 = vmatpush.msra.mxu0 0.0
        %892 = vmatpush.msra.mxu0 0.0
        %893 = vmatpush.msra.mxu0 0.0
        %894 = vmatpush.msra.mxu0 0.0
        %895 = vmatpush.msra.mxu0 0.0
        %896 = vmatpush.msra.mxu0 0.0
        %897 = vmatpush.msra.mxu0 0.0
        %898 = vmatpush.msra.mxu0 0.0
        %899 = vmatpush.msra.mxu0 0.0
        %900 = vmatpush.msra.mxu0 0.0
        %901 = vmatpush.msra.mxu0 0.0
        %902 = vmatpush.msra.mxu0 %v887
        %903 = vmatpush.msra.mxu0 %v886
        %904 = vmatmul.f32.gmra.mxu0 %v733
        %v905 = vpop.f32.mrf.mxu0
        %v906 = vadd.f32 0.0, %v905
        %907 = vdwg.mxu0
        %v908 = vsel %vm756, %v859, -1e+30
        %v909 = vsel %vm756, %v862, -1e+30
        %v910 = vsel %vm709, %v908, -inf
        %911 = vmax.xlane.f32.xlu0 %v910
        %v912 = vpop.xlane.xlu0 %911
        %v913 = vsel %vm709, %v909, -inf
        %914 = vmax.xlane.f32.xlu0 %v913
        %v915 = vpop.xlane.xlu0 %914
        %v916 = vsub.f32 %v908, %v912
        %v917 = vsub.f32 %v909, %v915
        %v918 = vmul.f32 %v916, 1.442695
        %v919 = vpow.pop %v918
        %v920 = vmul.f32 %v917, 1.442695
        %v921 = vpow.pop %v920
        %v922 = vsel %vm709, %v919, 0.0
        %923 = vadd.xlane.f32.xlu0 %v922
        %v924 = vpop.xlane.xlu0 %923
        %v925 = vsel %vm709, %v921, 0.0
        %926 = vadd.xlane.f32.xlu0 %v925
        %v927 = vpop.xlane.xlu0 %926
        %v928 = vrcp.pop %v924
        %v929 = vrcp.pop %v927
        %v930 = vmul.f32 %v919, %v928
        %v931 = vmul.f32 %v921, %v929
        %932 = vmatpush.msra.mxu0 0.0
        %933 = vmatpush.msra.mxu0 0.0
        %934 = vmatpush.msra.mxu0 0.0
        %935 = vmatpush.msra.mxu0 0.0
        %936 = vmatpush.msra.mxu0 0.0
        %937 = vmatpush.msra.mxu0 0.0
        %938 = vmatpush.msra.mxu0 0.0
        %939 = vmatpush.msra.mxu0 0.0
        %940 = vmatpush.msra.mxu0 0.0
        %941 = vmatpush.msra.mxu0 0.0
        %942 = vmatpush.msra.mxu0 0.0
        %943 = vmatpush.msra.mxu0 0.0
        %944 = vmatpush.msra.mxu0 0.0
        %945 = vmatpush.msra.mxu0 0.0
        %946 = vmatpush.msra.mxu0 %v931
        %947 = vmatpush.msra.mxu0 %v930
        %948 = vmatmul.f32.gmra.mxu0 %v733
        %v949 = vpop.f32.mrf.mxu0
        %v950 = vadd.f32 0.0, %v949
        %951 = vdwg.mxu0
        %v953 = vrot.slane %v950, 7
        %v955 = vsel %vm804, %v906, %v953
        %v957 = vsel %vm709, %v955, 0
        %v960 = vsel %vm709, %v625, 0
        %962 = vmatpush.xpose.msra.mxu0 0.0
        %963 = vmatpush.xpose.msra.mxu0 0.0
        %964 = vmatpush.xpose.msra.mxu0 0.0
        %965 = vmatpush.xpose.msra.mxu0 0.0
        %966 = vmatpush.xpose.msra.mxu0 0.0
        %967 = vmatpush.xpose.msra.mxu0 0.0
        %968 = vmatpush.xpose.msra.mxu0 0.0
        %969 = vmatpush.xpose.msra.mxu0 0.0
        %970 = vmatpush.xpose.msra.mxu0 0.0
        %971 = vmatpush.xpose.msra.mxu0 0.0
        %972 = vmatpush.xpose.msra.mxu0 0.0
        %973 = vmatpush.xpose.msra.mxu0 0.0
        %974 = vmatpush.xpose.msra.mxu0 0.0
        %975 = vmatpush.xpose.msra.mxu0 0.0
        %976 = vmatpush.xpose.msra.mxu0 0.0
        %977 = vmatpush.xpose.msra.mxu0 %v960
        %978 = vmatmul.f32.gmra.mxu0 %v957
        %v979 = vpop.f32.mrf.mxu0
        %v980 = vadd.f32 0.0, %v979
        %981 = vdwg.mxu0
        %v982 = vld [vmem:[%s8 + $0x8] sm:$0xff]
        %v984 = vsel %vm675, %v980, 0
        %986 = vmatpush.msra.mxu0 0.0
        %987 = vmatpush.msra.mxu0 0.0
        %988 = vmatpush.msra.mxu0 0.0
        %989 = vmatpush.msra.mxu0 0.0
        %990 = vmatpush.msra.mxu0 0.0
        %991 = vmatpush.msra.mxu0 0.0
        %992 = vmatpush.msra.mxu0 0.0
        %993 = vmatpush.msra.mxu0 0.0
        %994 = vmatpush.msra.mxu0 0.0
        %995 = vmatpush.msra.mxu0 0.0
        %996 = vmatpush.msra.mxu0 0.0
        %997 = vmatpush.msra.mxu0 0.0
        %998 = vmatpush.msra.mxu0 0.0
        %999 = vmatpush.msra.mxu0 0.0
        %1000 = vmatpush.msra.mxu0 0.0
        %1001 = vmatpush.msra.mxu0 %v982
        %1002 = vmatmul.f32.gmra.mxu0 %v984
        %v1003 = vpop.f32.mrf.mxu0
        %v1004 = vadd.f32 0.0, %v1003
        %1005 = vdwg.mxu0
        %v1007 = vsel %vm675, %v830, 0
        %1009 = vmatpush.msra.mxu0 0.0
        %1010 = vmatpush.msra.mxu0 0.0
        %1011 = vmatpush.msra.mxu0 0.0
        %1012 = vmatpush.msra.mxu0 0.0
        %1013 = vmatpush.msra.mxu0 0.0
        %1014 = vmatpush.msra.mxu0 0.0
        %1015 = vmatpush.msra.mxu0 0.0
        %1016 = vmatpush.msra.mxu0 0.0
        %1017 = vmatpush.msra.mxu0 0.0
        %1018 = vmatpush.msra.mxu0 0.0
        %1019 = vmatpush.msra.mxu0 0.0
        %1020 = vmatpush.msra.mxu0 0.0
        %1021 = vmatpush.msra.mxu0 0.0
        %1022 = vmatpush.msra.mxu0 0.0
        %1023 = vmatpush.msra.mxu0 0.0
        %1024 = vmatpush.msra.mxu0 %v832
        %1025 = vmatmul.f32.gmra.mxu0 %v1007
        %v1026 = vpop.f32.mrf.mxu0
        %v1027 = vadd.f32 %v1004, %v1026
        %1028 = vdwg.mxu0
        %1029 = vrot.lane.b32.xlu0 %v404, 112
        %v1030 = vpop.permute.xlu0 %1029
        %1031 = vrot.lane.b32.xlu0 %v406, 112
        %v1032 = vpop.permute.xlu0 %1031
        %v1033 = vsel %vm675, %v1030, 0
        %v1035 = vsel %vm675, %v1032, 0
        %1037 = vmatpush.msra.mxu0 0.0
        %1038 = vmatpush.msra.mxu0 0.0
        %1039 = vmatpush.msra.mxu0 0.0
        %1040 = vmatpush.msra.mxu0 0.0
        %1041 = vmatpush.msra.mxu0 0.0
        %1042 = vmatpush.msra.mxu0 0.0
        %1043 = vmatpush.msra.mxu0 0.0
        %1044 = vmatpush.msra.mxu0 0.0
        %1045 = vmatpush.msra.mxu0 0.0
        %1046 = vmatpush.msra.mxu0 0.0
        %1047 = vmatpush.msra.mxu0 0.0
        %1048 = vmatpush.msra.mxu0 0.0
        %1049 = vmatpush.msra.mxu0 0.0
        %1050 = vmatpush.msra.mxu0 0.0
        %1051 = vmatpush.msra.mxu0 0.0
        %1052 = vmatpush.msra.mxu0 %v511
        %1053 = vmatmul.f32.gmra.mxu0 %v1033
        %v1054 = vpop.f32.mrf.mxu0
        %v1055 = vadd.f32 0.0, %v1054
        %1056 = vmatmul.f32.gmra.mxu0 %v1035
        %v1057 = vpop.f32.mrf.mxu0
        %v1058 = vadd.f32 0.0, %v1057
        %1059 = vdwg.mxu0
        %v1060 = vsel %vm706, %v1055, -1e+30
        %v1061 = vsel %vm706, %v1058, -1e+30
        %v1062 = vsel %vm709, %v1060, -inf
        %1063 = vmax.xlane.f32.xlu0 %v1062
        %v1064 = vpop.xlane.xlu0 %1063
        %v1065 = vsel %vm709, %v1061, -inf
        %1066 = vmax.xlane.f32.xlu0 %v1065
        %v1067 = vpop.xlane.xlu0 %1066
        %v1068 = vsub.f32 %v1060, %v1064
        %v1069 = vsub.f32 %v1061, %v1067
        %v1070 = vmul.f32 %v1068, 1.442695
        %v1071 = vpow.pop %v1070
        %v1072 = vmul.f32 %v1069, 1.442695
        %v1073 = vpow.pop %v1072
        %v1074 = vsel %vm709, %v1071, 0.0
        %1075 = vadd.xlane.f32.xlu0 %v1074
        %v1076 = vpop.xlane.xlu0 %1075
        %v1077 = vsel %vm709, %v1073, 0.0
        %1078 = vadd.xlane.f32.xlu0 %v1077
        %v1079 = vpop.xlane.xlu0 %1078
        %v1080 = vrcp.pop %v1076
        %v1081 = vrcp.pop %v1079
        %v1082 = vmul.f32 %v1071, %v1080
        %v1083 = vmul.f32 %v1073, %v1081
        %1084 = vmatpush.msra.mxu0 0.0
        %1085 = vmatpush.msra.mxu0 0.0
        %1086 = vmatpush.msra.mxu0 0.0
        %1087 = vmatpush.msra.mxu0 0.0
        %1088 = vmatpush.msra.mxu0 0.0
        %1089 = vmatpush.msra.mxu0 0.0
        %1090 = vmatpush.msra.mxu0 0.0
        %1091 = vmatpush.msra.mxu0 0.0
        %1092 = vmatpush.msra.mxu0 0.0
        %1093 = vmatpush.msra.mxu0 0.0
        %1094 = vmatpush.msra.mxu0 0.0
        %1095 = vmatpush.msra.mxu0 0.0
        %1096 = vmatpush.msra.mxu0 0.0
        %1097 = vmatpush.msra.mxu0 0.0
        %1098 = vmatpush.msra.mxu0 %v1083
        %1099 = vmatpush.msra.mxu0 %v1082
        %1100 = vmatmul.f32.gmra.mxu0 %v733
        %v1101 = vpop.f32.mrf.mxu0
        %v1102 = vadd.f32 0.0, %v1101
        %1103 = vdwg.mxu0
        %v1104 = vsel %vm756, %v1055, -1e+30
        %v1105 = vsel %vm756, %v1058, -1e+30
        %v1106 = vsel %vm709, %v1104, -inf
        %1107 = vmax.xlane.f32.xlu0 %v1106
        %v1108 = vpop.xlane.xlu0 %1107
        %v1109 = vsel %vm709, %v1105, -inf
        %1110 = vmax.xlane.f32.xlu0 %v1109
        %v1111 = vpop.xlane.xlu0 %1110
        %v1112 = vsub.f32 %v1104, %v1108
        %v1113 = vsub.f32 %v1105, %v1111
        %v1114 = vmul.f32 %v1112, 1.442695
        %v1115 = vpow.pop %v1114
        %v1116 = vmul.f32 %v1113, 1.442695
        %v1117 = vpow.pop %v1116
        %v1118 = vsel %vm709, %v1115, 0.0
        %1119 = vadd.xlane.f32.xlu0 %v1118
        %v1120 = vpop.xlane.xlu0 %1119
        %v1121 = vsel %vm709, %v1117, 0.0
        %1122 = vadd.xlane.f32.xlu0 %v1121
        %v1123 = vpop.xlane.xlu0 %1122
        %v1124 = vrcp.pop %v1120
        %v1125 = vrcp.pop %v1123
        %v1126 = vmul.f32 %v1115, %v1124
        %v1127 = vmul.f32 %v1117, %v1125
        %1128 = vmatpush.msra.mxu0 0.0
        %1129 = vmatpush.msra.mxu0 0.0
        %1130 = vmatpush.msra.mxu0 0.0
        %1131 = vmatpush.msra.mxu0 0.0
        %1132 = vmatpush.msra.mxu0 0.0
        %1133 = vmatpush.msra.mxu0 0.0
        %1134 = vmatpush.msra.mxu0 0.0
        %1135 = vmatpush.msra.mxu0 0.0
        %1136 = vmatpush.msra.mxu0 0.0
        %1137 = vmatpush.msra.mxu0 0.0
        %1138 = vmatpush.msra.mxu0 0.0
        %1139 = vmatpush.msra.mxu0 0.0
        %1140 = vmatpush.msra.mxu0 0.0
        %1141 = vmatpush.msra.mxu0 0.0
        %1142 = vmatpush.msra.mxu0 %v1127
        %1143 = vmatpush.msra.mxu0 %v1126
        %1144 = vmatmul.f32.gmra.mxu0 %v733
        %v1145 = vpop.f32.mrf.mxu0
        %v1146 = vadd.f32 0.0, %v1145
        %1147 = vdwg.mxu0
        %v1149 = vrot.slane %v1146, 7
        %v1151 = vsel %vm804, %v1102, %v1149
        %v1153 = vsel %vm709, %v1151, 0
        %v1156 = vsel %vm709, %v628, 0
        %1158 = vmatpush.xpose.msra.mxu0 0.0
        %1159 = vmatpush.xpose.msra.mxu0 0.0
        %1160 = vmatpush.xpose.msra.mxu0 0.0
        %1161 = vmatpush.xpose.msra.mxu0 0.0
        %1162 = vmatpush.xpose.msra.mxu0 0.0
        %1163 = vmatpush.xpose.msra.mxu0 0.0
        %1164 = vmatpush.xpose.msra.mxu0 0.0
        %1165 = vmatpush.xpose.msra.mxu0 0.0
        %1166 = vmatpush.xpose.msra.mxu0 0.0
        %1167 = vmatpush.xpose.msra.mxu0 0.0
        %1168 = vmatpush.xpose.msra.mxu0 0.0
        %1169 = vmatpush.xpose.msra.mxu0 0.0
        %1170 = vmatpush.xpose.msra.mxu0 0.0
        %1171 = vmatpush.xpose.msra.mxu0 0.0
        %1172 = vmatpush.xpose.msra.mxu0 0.0
        %1173 = vmatpush.xpose.msra.mxu0 %v1156
        %1174 = vmatmul.f32.gmra.mxu0 %v1153
        %v1175 = vpop.f32.mrf.mxu0
        %v1176 = vadd.f32 0.0, %v1175
        %1177 = vdwg.mxu0
        %v1178 = vld [vmem:[%s8 + $0x10] sm:$0xff]
        %v1180 = vsel %vm675, %v1176, 0
        %1182 = vmatpush.msra.mxu0 0.0
        %1183 = vmatpush.msra.mxu0 0.0
        %1184 = vmatpush.msra.mxu0 0.0
        %1185 = vmatpush.msra.mxu0 0.0
        %1186 = vmatpush.msra.mxu0 0.0
        %1187 = vmatpush.msra.mxu0 0.0
        %1188 = vmatpush.msra.mxu0 0.0
        %1189 = vmatpush.msra.mxu0 0.0
        %1190 = vmatpush.msra.mxu0 0.0
        %1191 = vmatpush.msra.mxu0 0.0
        %1192 = vmatpush.msra.mxu0 0.0
        %1193 = vmatpush.msra.mxu0 0.0
        %1194 = vmatpush.msra.mxu0 0.0
        %1195 = vmatpush.msra.mxu0 0.0
        %1196 = vmatpush.msra.mxu0 0.0
        %1197 = vmatpush.msra.mxu0 %v1178
        %1198 = vmatmul.f32.gmra.mxu0 %v1180
        %v1199 = vpop.f32.mrf.mxu0
        %v1200 = vadd.f32 0.0, %v1199
        %1201 = vdwg.mxu0
        %v1202 = vadd.f32 %v1027, %v1200
        %1203 = vrot.lane.b32.xlu0 %v404, 104
        %v1204 = vpop.permute.xlu0 %1203
        %1205 = vrot.lane.b32.xlu0 %v406, 104
        %v1206 = vpop.permute.xlu0 %1205
        %v1207 = vsel %vm675, %v1204, 0
        %v1209 = vsel %vm675, %v1206, 0
        %1211 = vmatpush.msra.mxu0 0.0
        %1212 = vmatpush.msra.mxu0 0.0
        %1213 = vmatpush.msra.mxu0 0.0
        %1214 = vmatpush.msra.mxu0 0.0
        %1215 = vmatpush.msra.mxu0 0.0
        %1216 = vmatpush.msra.mxu0 0.0
        %1217 = vmatpush.msra.mxu0 0.0
        %1218 = vmatpush.msra.mxu0 0.0
        %1219 = vmatpush.msra.mxu0 0.0
        %1220 = vmatpush.msra.mxu0 0.0
        %1221 = vmatpush.msra.mxu0 0.0
        %1222 = vmatpush.msra.mxu0 0.0
        %1223 = vmatpush.msra.mxu0 0.0
        %1224 = vmatpush.msra.mxu0 0.0
        %1225 = vmatpush.msra.mxu0 0.0
        %1226 = vmatpush.msra.mxu0 %v513
        %1227 = vmatmul.f32.gmra.mxu0 %v1207
        %v1228 = vpop.f32.mrf.mxu0
        %v1229 = vadd.f32 0.0, %v1228
        %1230 = vmatmul.f32.gmra.mxu0 %v1209
        %v1231 = vpop.f32.mrf.mxu0
        %v1232 = vadd.f32 0.0, %v1231
        %1233 = vdwg.mxu0
        %v1234 = vsel %vm706, %v1229, -1e+30
        %v1235 = vsel %vm706, %v1232, -1e+30
        %v1236 = vsel %vm709, %v1234, -inf
        %1237 = vmax.xlane.f32.xlu0 %v1236
        %v1238 = vpop.xlane.xlu0 %1237
        %v1239 = vsel %vm709, %v1235, -inf
        %1240 = vmax.xlane.f32.xlu0 %v1239
        %v1241 = vpop.xlane.xlu0 %1240
        %v1242 = vsub.f32 %v1234, %v1238
        %v1243 = vsub.f32 %v1235, %v1241
        %v1244 = vmul.f32 %v1242, 1.442695
        %v1245 = vpow.pop %v1244
        %v1246 = vmul.f32 %v1243, 1.442695
        %v1247 = vpow.pop %v1246
        %v1248 = vsel %vm709, %v1245, 0.0
        %1249 = vadd.xlane.f32.xlu0 %v1248
        %v1250 = vpop.xlane.xlu0 %1249
        %v1251 = vsel %vm709, %v1247, 0.0
        %1252 = vadd.xlane.f32.xlu0 %v1251
        %v1253 = vpop.xlane.xlu0 %1252
        %v1254 = vrcp.pop %v1250
        %v1255 = vrcp.pop %v1253
        %v1256 = vmul.f32 %v1245, %v1254
        %v1257 = vmul.f32 %v1247, %v1255
        %1258 = vmatpush.msra.mxu0 0.0
        %1259 = vmatpush.msra.mxu0 0.0
        %1260 = vmatpush.msra.mxu0 0.0
        %1261 = vmatpush.msra.mxu0 0.0
        %1262 = vmatpush.msra.mxu0 0.0
        %1263 = vmatpush.msra.mxu0 0.0
        %1264 = vmatpush.msra.mxu0 0.0
        %1265 = vmatpush.msra.mxu0 0.0
        %1266 = vmatpush.msra.mxu0 0.0
        %1267 = vmatpush.msra.mxu0 0.0
        %1268 = vmatpush.msra.mxu0 0.0
        %1269 = vmatpush.msra.mxu0 0.0
        %1270 = vmatpush.msra.mxu0 0.0
        %1271 = vmatpush.msra.mxu0 0.0
        %1272 = vmatpush.msra.mxu0 %v1257
        %1273 = vmatpush.msra.mxu0 %v1256
        %1274 = vmatmul.f32.gmra.mxu0 %v733
        %v1275 = vpop.f32.mrf.mxu0
        %v1276 = vadd.f32 0.0, %v1275
        %1277 = vdwg.mxu0
        %v1278 = vsel %vm756, %v1229, -1e+30
        %v1279 = vsel %vm756, %v1232, -1e+30
        %v1280 = vsel %vm709, %v1278, -inf
        %1281 = vmax.xlane.f32.xlu0 %v1280
        %v1282 = vpop.xlane.xlu0 %1281
        %v1283 = vsel %vm709, %v1279, -inf
        %1284 = vmax.xlane.f32.xlu0 %v1283
        %v1285 = vpop.xlane.xlu0 %1284
        %v1286 = vsub.f32 %v1278, %v1282
        %v1287 = vsub.f32 %v1279, %v1285
        %v1288 = vmul.f32 %v1286, 1.442695
        %v1289 = vpow.pop %v1288
        %v1290 = vmul.f32 %v1287, 1.442695
        %v1291 = vpow.pop %v1290
        %v1292 = vsel %vm709, %v1289, 0.0
        %1293 = vadd.xlane.f32.xlu0 %v1292
        %v1294 = vpop.xlane.xlu0 %1293
        %v1295 = vsel %vm709, %v1291, 0.0
        %1296 = vadd.xlane.f32.xlu0 %v1295
        %v1297 = vpop.xlane.xlu0 %1296
        %v1298 = vrcp.pop %v1294
        %v1299 = vrcp.pop %v1297
        %v1300 = vmul.f32 %v1289, %v1298
        %v1301 = vmul.f32 %v1291, %v1299
        %1302 = vmatpush.msra.mxu0 0.0
        %1303 = vmatpush.msra.mxu0 0.0
        %1304 = vmatpush.msra.mxu0 0.0
        %1305 = vmatpush.msra.mxu0 0.0
        %1306 = vmatpush.msra.mxu0 0.0
        %1307 = vmatpush.msra.mxu0 0.0
        %1308 = vmatpush.msra.mxu0 0.0
        %1309 = vmatpush.msra.mxu0 0.0
        %1310 = vmatpush.msra.mxu0 0.0
        %1311 = vmatpush.msra.mxu0 0.0
        %1312 = vmatpush.msra.mxu0 0.0
        %1313 = vmatpush.msra.mxu0 0.0
        %1314 = vmatpush.msra.mxu0 0.0
        %1315 = vmatpush.msra.mxu0 0.0
        %1316 = vmatpush.msra.mxu0 %v1301
        %1317 = vmatpush.msra.mxu0 %v1300
        %1318 = vmatmul.f32.gmra.mxu0 %v733
        %v1319 = vpop.f32.mrf.mxu0
        %v1320 = vadd.f32 0.0, %v1319
        %1321 = vdwg.mxu0
        %v1323 = vrot.slane %v1320, 7
        %v1325 = vsel %vm804, %v1276, %v1323
        %v1327 = vsel %vm709, %v1325, 0
        %v1330 = vsel %vm709, %v630, 0
        %1332 = vmatpush.xpose.msra.mxu0 0.0
        %1333 = vmatpush.xpose.msra.mxu0 0.0
        %1334 = vmatpush.xpose.msra.mxu0 0.0
        %1335 = vmatpush.xpose.msra.mxu0 0.0
        %1336 = vmatpush.xpose.msra.mxu0 0.0
        %1337 = vmatpush.xpose.msra.mxu0 0.0
        %1338 = vmatpush.xpose.msra.mxu0 0.0
        %1339 = vmatpush.xpose.msra.mxu0 0.0
        %1340 = vmatpush.xpose.msra.mxu0 0.0
        %1341 = vmatpush.xpose.msra.mxu0 0.0
        %1342 = vmatpush.xpose.msra.mxu0 0.0
        %1343 = vmatpush.xpose.msra.mxu0 0.0
        %1344 = vmatpush.xpose.msra.mxu0 0.0
        %1345 = vmatpush.xpose.msra.mxu0 0.0
        %1346 = vmatpush.xpose.msra.mxu0 0.0
        %1347 = vmatpush.xpose.msra.mxu0 %v1330
        %1348 = vmatmul.f32.gmra.mxu0 %v1327
        %v1349 = vpop.f32.mrf.mxu0
        %v1350 = vadd.f32 0.0, %v1349
        %1351 = vdwg.mxu0
        %v1352 = vld [vmem:[%s8 + $0x18] sm:$0xff]
        %v1354 = vsel %vm675, %v1350, 0
        %1356 = vmatpush.msra.mxu0 0.0
        %1357 = vmatpush.msra.mxu0 0.0
        %1358 = vmatpush.msra.mxu0 0.0
        %1359 = vmatpush.msra.mxu0 0.0
        %1360 = vmatpush.msra.mxu0 0.0
        %1361 = vmatpush.msra.mxu0 0.0
        %1362 = vmatpush.msra.mxu0 0.0
        %1363 = vmatpush.msra.mxu0 0.0
        %1364 = vmatpush.msra.mxu0 0.0
        %1365 = vmatpush.msra.mxu0 0.0
        %1366 = vmatpush.msra.mxu0 0.0
        %1367 = vmatpush.msra.mxu0 0.0
        %1368 = vmatpush.msra.mxu0 0.0
        %1369 = vmatpush.msra.mxu0 0.0
        %1370 = vmatpush.msra.mxu0 0.0
        %1371 = vmatpush.msra.mxu0 %v1352
        %1372 = vmatmul.f32.gmra.mxu0 %v1354
        %v1373 = vpop.f32.mrf.mxu0
        %v1374 = vadd.f32 0.0, %v1373
        %1375 = vdwg.mxu0
        %v1376 = vadd.f32 %v1202, %v1374
        %1377 = vrot.lane.b32.xlu0 %v404, 96
        %v1378 = vpop.permute.xlu0 %1377
        %1379 = vrot.lane.b32.xlu0 %v406, 96
        %v1380 = vpop.permute.xlu0 %1379
        %v1381 = vsel %vm675, %v1378, 0
        %v1383 = vsel %vm675, %v1380, 0
        %1385 = vmatpush.msra.mxu0 0.0
        %1386 = vmatpush.msra.mxu0 0.0
        %1387 = vmatpush.msra.mxu0 0.0
        %1388 = vmatpush.msra.mxu0 0.0
        %1389 = vmatpush.msra.mxu0 0.0
        %1390 = vmatpush.msra.mxu0 0.0
        %1391 = vmatpush.msra.mxu0 0.0
        %1392 = vmatpush.msra.mxu0 0.0
        %1393 = vmatpush.msra.mxu0 0.0
        %1394 = vmatpush.msra.mxu0 0.0
        %1395 = vmatpush.msra.mxu0 0.0
        %1396 = vmatpush.msra.mxu0 0.0
        %1397 = vmatpush.msra.mxu0 0.0
        %1398 = vmatpush.msra.mxu0 0.0
        %1399 = vmatpush.msra.mxu0 0.0
        %1400 = vmatpush.msra.mxu0 %v516
        %1401 = vmatmul.f32.gmra.mxu0 %v1381
        %v1402 = vpop.f32.mrf.mxu0
        %v1403 = vadd.f32 0.0, %v1402
        %1404 = vmatmul.f32.gmra.mxu0 %v1383
        %v1405 = vpop.f32.mrf.mxu0
        %v1406 = vadd.f32 0.0, %v1405
        %1407 = vdwg.mxu0
        %v1408 = vsel %vm706, %v1403, -1e+30
        %v1409 = vsel %vm706, %v1406, -1e+30
        %v1410 = vsel %vm709, %v1408, -inf
        %1411 = vmax.xlane.f32.xlu0 %v1410
        %v1412 = vpop.xlane.xlu0 %1411
        %v1413 = vsel %vm709, %v1409, -inf
        %1414 = vmax.xlane.f32.xlu0 %v1413
        %v1415 = vpop.xlane.xlu0 %1414
        %v1416 = vsub.f32 %v1408, %v1412
        %v1417 = vsub.f32 %v1409, %v1415
        %v1418 = vmul.f32 %v1416, 1.442695
        %v1419 = vpow.pop %v1418
        %v1420 = vmul.f32 %v1417, 1.442695
        %v1421 = vpow.pop %v1420
        %v1422 = vsel %vm709, %v1419, 0.0
        %1423 = vadd.xlane.f32.xlu0 %v1422
        %v1424 = vpop.xlane.xlu0 %1423
        %v1425 = vsel %vm709, %v1421, 0.0
        %1426 = vadd.xlane.f32.xlu0 %v1425
        %v1427 = vpop.xlane.xlu0 %1426
        %v1428 = vrcp.pop %v1424
        %v1429 = vrcp.pop %v1427
        %v1430 = vmul.f32 %v1419, %v1428
        %v1431 = vmul.f32 %v1421, %v1429
        %1432 = vmatpush.msra.mxu0 0.0
        %1433 = vmatpush.msra.mxu0 0.0
        %1434 = vmatpush.msra.mxu0 0.0
        %1435 = vmatpush.msra.mxu0 0.0
        %1436 = vmatpush.msra.mxu0 0.0
        %1437 = vmatpush.msra.mxu0 0.0
        %1438 = vmatpush.msra.mxu0 0.0
        %1439 = vmatpush.msra.mxu0 0.0
        %1440 = vmatpush.msra.mxu0 0.0
        %1441 = vmatpush.msra.mxu0 0.0
        %1442 = vmatpush.msra.mxu0 0.0
        %1443 = vmatpush.msra.mxu0 0.0
        %1444 = vmatpush.msra.mxu0 0.0
        %1445 = vmatpush.msra.mxu0 0.0
        %1446 = vmatpush.msra.mxu0 %v1431
        %1447 = vmatpush.msra.mxu0 %v1430
        %1448 = vmatmul.f32.gmra.mxu0 %v733
        %v1449 = vpop.f32.mrf.mxu0
        %v1450 = vadd.f32 0.0, %v1449
        %1451 = vdwg.mxu0
        %v1452 = vsel %vm756, %v1403, -1e+30
        %v1453 = vsel %vm756, %v1406, -1e+30
        %v1454 = vsel %vm709, %v1452, -inf
        %1455 = vmax.xlane.f32.xlu0 %v1454
        %v1456 = vpop.xlane.xlu0 %1455
        %v1457 = vsel %vm709, %v1453, -inf
        %1458 = vmax.xlane.f32.xlu0 %v1457
        %v1459 = vpop.xlane.xlu0 %1458
        %v1460 = vsub.f32 %v1452, %v1456
        %v1461 = vsub.f32 %v1453, %v1459
        %v1462 = vmul.f32 %v1460, 1.442695
        %v1463 = vpow.pop %v1462
        %v1464 = vmul.f32 %v1461, 1.442695
        %v1465 = vpow.pop %v1464
        %v1466 = vsel %vm709, %v1463, 0.0
        %1467 = vadd.xlane.f32.xlu0 %v1466
        %v1468 = vpop.xlane.xlu0 %1467
        %v1469 = vsel %vm709, %v1465, 0.0
        %1470 = vadd.xlane.f32.xlu0 %v1469
        %v1471 = vpop.xlane.xlu0 %1470
        %v1472 = vrcp.pop %v1468
        %v1473 = vrcp.pop %v1471
        %v1474 = vmul.f32 %v1463, %v1472
        %v1475 = vmul.f32 %v1465, %v1473
        %1476 = vmatpush.msra.mxu0 0.0
        %1477 = vmatpush.msra.mxu0 0.0
        %1478 = vmatpush.msra.mxu0 0.0
        %1479 = vmatpush.msra.mxu0 0.0
        %1480 = vmatpush.msra.mxu0 0.0
        %1481 = vmatpush.msra.mxu0 0.0
        %1482 = vmatpush.msra.mxu0 0.0
        %1483 = vmatpush.msra.mxu0 0.0
        %1484 = vmatpush.msra.mxu0 0.0
        %1485 = vmatpush.msra.mxu0 0.0
        %1486 = vmatpush.msra.mxu0 0.0
        %1487 = vmatpush.msra.mxu0 0.0
        %1488 = vmatpush.msra.mxu0 0.0
        %1489 = vmatpush.msra.mxu0 0.0
        %1490 = vmatpush.msra.mxu0 %v1475
        %1491 = vmatpush.msra.mxu0 %v1474
        %1492 = vmatmul.f32.gmra.mxu0 %v733
        %v1493 = vpop.f32.mrf.mxu0
        %v1494 = vadd.f32 0.0, %v1493
        %1495 = vdwg.mxu0
        %v1497 = vrot.slane %v1494, 7
        %v1499 = vsel %vm804, %v1450, %v1497
        %v1501 = vsel %vm709, %v1499, 0
        %v1504 = vsel %vm709, %v633, 0
        %1506 = vmatpush.xpose.msra.mxu0 0.0
        %1507 = vmatpush.xpose.msra.mxu0 0.0
        %1508 = vmatpush.xpose.msra.mxu0 0.0
        %1509 = vmatpush.xpose.msra.mxu0 0.0
        %1510 = vmatpush.xpose.msra.mxu0 0.0
        %1511 = vmatpush.xpose.msra.mxu0 0.0
        %1512 = vmatpush.xpose.msra.mxu0 0.0
        %1513 = vmatpush.xpose.msra.mxu0 0.0
        %1514 = vmatpush.xpose.msra.mxu0 0.0
        %1515 = vmatpush.xpose.msra.mxu0 0.0
        %1516 = vmatpush.xpose.msra.mxu0 0.0
        %1517 = vmatpush.xpose.msra.mxu0 0.0
        %1518 = vmatpush.xpose.msra.mxu0 0.0
        %1519 = vmatpush.xpose.msra.mxu0 0.0
        %1520 = vmatpush.xpose.msra.mxu0 0.0
        %1521 = vmatpush.xpose.msra.mxu0 %v1504
        %1522 = vmatmul.f32.gmra.mxu0 %v1501
        %v1523 = vpop.f32.mrf.mxu0
        %v1524 = vadd.f32 0.0, %v1523
        %1525 = vdwg.mxu0
        %v1526 = vld [vmem:[%s8 + $0x20] sm:$0xff]
        %v1528 = vsel %vm675, %v1524, 0
        %1530 = vmatpush.msra.mxu0 0.0
        %1531 = vmatpush.msra.mxu0 0.0
        %1532 = vmatpush.msra.mxu0 0.0
        %1533 = vmatpush.msra.mxu0 0.0
        %1534 = vmatpush.msra.mxu0 0.0
        %1535 = vmatpush.msra.mxu0 0.0
        %1536 = vmatpush.msra.mxu0 0.0
        %1537 = vmatpush.msra.mxu0 0.0
        %1538 = vmatpush.msra.mxu0 0.0
        %1539 = vmatpush.msra.mxu0 0.0
        %1540 = vmatpush.msra.mxu0 0.0
        %1541 = vmatpush.msra.mxu0 0.0
        %1542 = vmatpush.msra.mxu0 0.0
        %1543 = vmatpush.msra.mxu0 0.0
        %1544 = vmatpush.msra.mxu0 0.0
        %1545 = vmatpush.msra.mxu0 %v1526
        %1546 = vmatmul.f32.gmra.mxu0 %v1528
        %v1547 = vpop.f32.mrf.mxu0
        %v1548 = vadd.f32 0.0, %v1547
        %1549 = vdwg.mxu0
        %v1550 = vadd.f32 %v1376, %v1548
        %1551 = vrot.lane.b32.xlu0 %v404, 88
        %v1552 = vpop.permute.xlu0 %1551
        %1553 = vrot.lane.b32.xlu0 %v406, 88
        %v1554 = vpop.permute.xlu0 %1553
        %v1555 = vsel %vm675, %v1552, 0
        %v1557 = vsel %vm675, %v1554, 0
        %1559 = vmatpush.msra.mxu0 0.0
        %1560 = vmatpush.msra.mxu0 0.0
        %1561 = vmatpush.msra.mxu0 0.0
        %1562 = vmatpush.msra.mxu0 0.0
        %1563 = vmatpush.msra.mxu0 0.0
        %1564 = vmatpush.msra.mxu0 0.0
        %1565 = vmatpush.msra.mxu0 0.0
        %1566 = vmatpush.msra.mxu0 0.0
        %1567 = vmatpush.msra.mxu0 0.0
        %1568 = vmatpush.msra.mxu0 0.0
        %1569 = vmatpush.msra.mxu0 0.0
        %1570 = vmatpush.msra.mxu0 0.0
        %1571 = vmatpush.msra.mxu0 0.0
        %1572 = vmatpush.msra.mxu0 0.0
        %1573 = vmatpush.msra.mxu0 0.0
        %1574 = vmatpush.msra.mxu0 %v518
        %1575 = vmatmul.f32.gmra.mxu0 %v1555
        %v1576 = vpop.f32.mrf.mxu0
        %v1577 = vadd.f32 0.0, %v1576
        %1578 = vmatmul.f32.gmra.mxu0 %v1557
        %v1579 = vpop.f32.mrf.mxu0
        %v1580 = vadd.f32 0.0, %v1579
        %1581 = vdwg.mxu0
        %v1582 = vsel %vm706, %v1577, -1e+30
        %v1583 = vsel %vm706, %v1580, -1e+30
        %v1584 = vsel %vm709, %v1582, -inf
        %1585 = vmax.xlane.f32.xlu0 %v1584
        %v1586 = vpop.xlane.xlu0 %1585
        %v1587 = vsel %vm709, %v1583, -inf
        %1588 = vmax.xlane.f32.xlu0 %v1587
        %v1589 = vpop.xlane.xlu0 %1588
        %v1590 = vsub.f32 %v1582, %v1586
        %v1591 = vsub.f32 %v1583, %v1589
        %v1592 = vmul.f32 %v1590, 1.442695
        %v1593 = vpow.pop %v1592
        %v1594 = vmul.f32 %v1591, 1.442695
        %v1595 = vpow.pop %v1594
        %v1596 = vsel %vm709, %v1593, 0.0
        %1597 = vadd.xlane.f32.xlu0 %v1596
        %v1598 = vpop.xlane.xlu0 %1597
        %v1599 = vsel %vm709, %v1595, 0.0
        %1600 = vadd.xlane.f32.xlu0 %v1599
        %v1601 = vpop.xlane.xlu0 %1600
        %v1602 = vrcp.pop %v1598
        %v1603 = vrcp.pop %v1601
        %v1604 = vmul.f32 %v1593, %v1602
        %v1605 = vmul.f32 %v1595, %v1603
        %1606 = vmatpush.msra.mxu0 0.0
        %1607 = vmatpush.msra.mxu0 0.0
        %1608 = vmatpush.msra.mxu0 0.0
        %1609 = vmatpush.msra.mxu0 0.0
        %1610 = vmatpush.msra.mxu0 0.0
        %1611 = vmatpush.msra.mxu0 0.0
        %1612 = vmatpush.msra.mxu0 0.0
        %1613 = vmatpush.msra.mxu0 0.0
        %1614 = vmatpush.msra.mxu0 0.0
        %1615 = vmatpush.msra.mxu0 0.0
        %1616 = vmatpush.msra.mxu0 0.0
        %1617 = vmatpush.msra.mxu0 0.0
        %1618 = vmatpush.msra.mxu0 0.0
        %1619 = vmatpush.msra.mxu0 0.0
        %1620 = vmatpush.msra.mxu0 %v1605
        %1621 = vmatpush.msra.mxu0 %v1604
        %1622 = vmatmul.f32.gmra.mxu0 %v733
        %v1623 = vpop.f32.mrf.mxu0
        %v1624 = vadd.f32 0.0, %v1623
        %1625 = vdwg.mxu0
        %v1626 = vsel %vm756, %v1577, -1e+30
        %v1627 = vsel %vm756, %v1580, -1e+30
        %v1628 = vsel %vm709, %v1626, -inf
        %1629 = vmax.xlane.f32.xlu0 %v1628
        %v1630 = vpop.xlane.xlu0 %1629
        %v1631 = vsel %vm709, %v1627, -inf
        %1632 = vmax.xlane.f32.xlu0 %v1631
        %v1633 = vpop.xlane.xlu0 %1632
        %v1634 = vsub.f32 %v1626, %v1630
        %v1635 = vsub.f32 %v1627, %v1633
        %v1636 = vmul.f32 %v1634, 1.442695
        %v1637 = vpow.pop %v1636
        %v1638 = vmul.f32 %v1635, 1.442695
        %v1639 = vpow.pop %v1638
        %v1640 = vsel %vm709, %v1637, 0.0
        %1641 = vadd.xlane.f32.xlu0 %v1640
        %v1642 = vpop.xlane.xlu0 %1641
        %v1643 = vsel %vm709, %v1639, 0.0
        %1644 = vadd.xlane.f32.xlu0 %v1643
        %v1645 = vpop.xlane.xlu0 %1644
        %v1646 = vrcp.pop %v1642
        %v1647 = vrcp.pop %v1645
        %v1648 = vmul.f32 %v1637, %v1646
        %v1649 = vmul.f32 %v1639, %v1647
        %1650 = vmatpush.msra.mxu0 0.0
        %1651 = vmatpush.msra.mxu0 0.0
        %1652 = vmatpush.msra.mxu0 0.0
        %1653 = vmatpush.msra.mxu0 0.0
        %1654 = vmatpush.msra.mxu0 0.0
        %1655 = vmatpush.msra.mxu0 0.0
        %1656 = vmatpush.msra.mxu0 0.0
        %1657 = vmatpush.msra.mxu0 0.0
        %1658 = vmatpush.msra.mxu0 0.0
        %1659 = vmatpush.msra.mxu0 0.0
        %1660 = vmatpush.msra.mxu0 0.0
        %1661 = vmatpush.msra.mxu0 0.0
        %1662 = vmatpush.msra.mxu0 0.0
        %1663 = vmatpush.msra.mxu0 0.0
        %1664 = vmatpush.msra.mxu0 %v1649
        %1665 = vmatpush.msra.mxu0 %v1648
        %1666 = vmatmul.f32.gmra.mxu0 %v733
        %v1667 = vpop.f32.mrf.mxu0
        %v1668 = vadd.f32 0.0, %v1667
        %1669 = vdwg.mxu0
        %v1671 = vrot.slane %v1668, 7
        %v1673 = vsel %vm804, %v1624, %v1671
        %v1675 = vsel %vm709, %v1673, 0
        %v1678 = vsel %vm709, %v635, 0
        %1680 = vmatpush.xpose.msra.mxu0 0.0
        %1681 = vmatpush.xpose.msra.mxu0 0.0
        %1682 = vmatpush.xpose.msra.mxu0 0.0
        %1683 = vmatpush.xpose.msra.mxu0 0.0
        %1684 = vmatpush.xpose.msra.mxu0 0.0
        %1685 = vmatpush.xpose.msra.mxu0 0.0
        %1686 = vmatpush.xpose.msra.mxu0 0.0
        %1687 = vmatpush.xpose.msra.mxu0 0.0
        %1688 = vmatpush.xpose.msra.mxu0 0.0
        %1689 = vmatpush.xpose.msra.mxu0 0.0
        %1690 = vmatpush.xpose.msra.mxu0 0.0
        %1691 = vmatpush.xpose.msra.mxu0 0.0
        %1692 = vmatpush.xpose.msra.mxu0 0.0
        %1693 = vmatpush.xpose.msra.mxu0 0.0
        %1694 = vmatpush.xpose.msra.mxu0 0.0
        %1695 = vmatpush.xpose.msra.mxu0 %v1678
        %1696 = vmatmul.f32.gmra.mxu0 %v1675
        %v1697 = vpop.f32.mrf.mxu0
        %v1698 = vadd.f32 0.0, %v1697
        %1699 = vdwg.mxu0
        %v1700 = vld [vmem:[%s8 + $0x28] sm:$0xff]
        %v1702 = vsel %vm675, %v1698, 0
        %1704 = vmatpush.msra.mxu0 0.0
        %1705 = vmatpush.msra.mxu0 0.0
        %1706 = vmatpush.msra.mxu0 0.0
        %1707 = vmatpush.msra.mxu0 0.0
        %1708 = vmatpush.msra.mxu0 0.0
        %1709 = vmatpush.msra.mxu0 0.0
        %1710 = vmatpush.msra.mxu0 0.0
        %1711 = vmatpush.msra.mxu0 0.0
        %1712 = vmatpush.msra.mxu0 0.0
        %1713 = vmatpush.msra.mxu0 0.0
        %1714 = vmatpush.msra.mxu0 0.0
        %1715 = vmatpush.msra.mxu0 0.0
        %1716 = vmatpush.msra.mxu0 0.0
        %1717 = vmatpush.msra.mxu0 0.0
        %1718 = vmatpush.msra.mxu0 0.0
        %1719 = vmatpush.msra.mxu0 %v1700
        %1720 = vmatmul.f32.gmra.mxu0 %v1702
        %v1721 = vpop.f32.mrf.mxu0
        %v1722 = vadd.f32 0.0, %v1721
        %1723 = vdwg.mxu0
        %v1724 = vadd.f32 %v1550, %v1722
        %1725 = vrot.lane.b32.xlu0 %v404, 80
        %v1726 = vpop.permute.xlu0 %1725
        %1727 = vrot.lane.b32.xlu0 %v406, 80
        %v1728 = vpop.permute.xlu0 %1727
        %v1729 = vsel %vm675, %v1726, 0
        %v1731 = vsel %vm675, %v1728, 0
        %1733 = vmatpush.msra.mxu0 0.0
        %1734 = vmatpush.msra.mxu0 0.0
        %1735 = vmatpush.msra.mxu0 0.0
        %1736 = vmatpush.msra.mxu0 0.0
        %1737 = vmatpush.msra.mxu0 0.0
        %1738 = vmatpush.msra.mxu0 0.0
        %1739 = vmatpush.msra.mxu0 0.0
        %1740 = vmatpush.msra.mxu0 0.0
        %1741 = vmatpush.msra.mxu0 0.0
        %1742 = vmatpush.msra.mxu0 0.0
        %1743 = vmatpush.msra.mxu0 0.0
        %1744 = vmatpush.msra.mxu0 0.0
        %1745 = vmatpush.msra.mxu0 0.0
        %1746 = vmatpush.msra.mxu0 0.0
        %1747 = vmatpush.msra.mxu0 0.0
        %1748 = vmatpush.msra.mxu0 %v521
        %1749 = vmatmul.f32.gmra.mxu0 %v1729
        %v1750 = vpop.f32.mrf.mxu0
        %v1751 = vadd.f32 0.0, %v1750
        %1752 = vmatmul.f32.gmra.mxu0 %v1731
        %v1753 = vpop.f32.mrf.mxu0
        %v1754 = vadd.f32 0.0, %v1753
        %1755 = vdwg.mxu0
        %v1756 = vsel %vm706, %v1751, -1e+30
        %v1757 = vsel %vm706, %v1754, -1e+30
        %v1758 = vsel %vm709, %v1756, -inf
        %1759 = vmax.xlane.f32.xlu0 %v1758
        %v1760 = vpop.xlane.xlu0 %1759
        %v1761 = vsel %vm709, %v1757, -inf
        %1762 = vmax.xlane.f32.xlu0 %v1761
        %v1763 = vpop.xlane.xlu0 %1762
        %v1764 = vsub.f32 %v1756, %v1760
        %v1765 = vsub.f32 %v1757, %v1763
        %v1766 = vmul.f32 %v1764, 1.442695
        %v1767 = vpow.pop %v1766
        %v1768 = vmul.f32 %v1765, 1.442695
        %v1769 = vpow.pop %v1768
        %v1770 = vsel %vm709, %v1767, 0.0
        %1771 = vadd.xlane.f32.xlu0 %v1770
        %v1772 = vpop.xlane.xlu0 %1771
        %v1773 = vsel %vm709, %v1769, 0.0
        %1774 = vadd.xlane.f32.xlu0 %v1773
        %v1775 = vpop.xlane.xlu0 %1774
        %v1776 = vrcp.pop %v1772
        %v1777 = vrcp.pop %v1775
        %v1778 = vmul.f32 %v1767, %v1776
        %v1779 = vmul.f32 %v1769, %v1777
        %1780 = vmatpush.msra.mxu0 0.0
        %1781 = vmatpush.msra.mxu0 0.0
        %1782 = vmatpush.msra.mxu0 0.0
        %1783 = vmatpush.msra.mxu0 0.0
        %1784 = vmatpush.msra.mxu0 0.0
        %1785 = vmatpush.msra.mxu0 0.0
        %1786 = vmatpush.msra.mxu0 0.0
        %1787 = vmatpush.msra.mxu0 0.0
        %1788 = vmatpush.msra.mxu0 0.0
        %1789 = vmatpush.msra.mxu0 0.0
        %1790 = vmatpush.msra.mxu0 0.0
        %1791 = vmatpush.msra.mxu0 0.0
        %1792 = vmatpush.msra.mxu0 0.0
        %1793 = vmatpush.msra.mxu0 0.0
        %1794 = vmatpush.msra.mxu0 %v1779
        %1795 = vmatpush.msra.mxu0 %v1778
        %1796 = vmatmul.f32.gmra.mxu0 %v733
        %v1797 = vpop.f32.mrf.mxu0
        %v1798 = vadd.f32 0.0, %v1797
        %1799 = vdwg.mxu0
        %v1800 = vsel %vm756, %v1751, -1e+30
        %v1801 = vsel %vm756, %v1754, -1e+30
        %v1802 = vsel %vm709, %v1800, -inf
        %1803 = vmax.xlane.f32.xlu0 %v1802
        %v1804 = vpop.xlane.xlu0 %1803
        %v1805 = vsel %vm709, %v1801, -inf
        %1806 = vmax.xlane.f32.xlu0 %v1805
        %v1807 = vpop.xlane.xlu0 %1806
        %v1808 = vsub.f32 %v1800, %v1804
        %v1809 = vsub.f32 %v1801, %v1807
        %v1810 = vmul.f32 %v1808, 1.442695
        %v1811 = vpow.pop %v1810
        %v1812 = vmul.f32 %v1809, 1.442695
        %v1813 = vpow.pop %v1812
        %v1814 = vsel %vm709, %v1811, 0.0
        %1815 = vadd.xlane.f32.xlu0 %v1814
        %v1816 = vpop.xlane.xlu0 %1815
        %v1817 = vsel %vm709, %v1813, 0.0
        %1818 = vadd.xlane.f32.xlu0 %v1817
        %v1819 = vpop.xlane.xlu0 %1818
        %v1820 = vrcp.pop %v1816
        %v1821 = vrcp.pop %v1819
        %v1822 = vmul.f32 %v1811, %v1820
        %v1823 = vmul.f32 %v1813, %v1821
        %1824 = vmatpush.msra.mxu0 0.0
        %1825 = vmatpush.msra.mxu0 0.0
        %1826 = vmatpush.msra.mxu0 0.0
        %1827 = vmatpush.msra.mxu0 0.0
        %1828 = vmatpush.msra.mxu0 0.0
        %1829 = vmatpush.msra.mxu0 0.0
        %1830 = vmatpush.msra.mxu0 0.0
        %1831 = vmatpush.msra.mxu0 0.0
        %1832 = vmatpush.msra.mxu0 0.0
        %1833 = vmatpush.msra.mxu0 0.0
        %1834 = vmatpush.msra.mxu0 0.0
        %1835 = vmatpush.msra.mxu0 0.0
        %1836 = vmatpush.msra.mxu0 0.0
        %1837 = vmatpush.msra.mxu0 0.0
        %1838 = vmatpush.msra.mxu0 %v1823
        %1839 = vmatpush.msra.mxu0 %v1822
        %1840 = vmatmul.f32.gmra.mxu0 %v733
        %v1841 = vpop.f32.mrf.mxu0
        %v1842 = vadd.f32 0.0, %v1841
        %1843 = vdwg.mxu0
        %v1845 = vrot.slane %v1842, 7
        %v1847 = vsel %vm804, %v1798, %v1845
        %v1849 = vsel %vm709, %v1847, 0
        %v1852 = vsel %vm709, %v638, 0
        %1854 = vmatpush.xpose.msra.mxu0 0.0
        %1855 = vmatpush.xpose.msra.mxu0 0.0
        %1856 = vmatpush.xpose.msra.mxu0 0.0
        %1857 = vmatpush.xpose.msra.mxu0 0.0
        %1858 = vmatpush.xpose.msra.mxu0 0.0
        %1859 = vmatpush.xpose.msra.mxu0 0.0
        %1860 = vmatpush.xpose.msra.mxu0 0.0
        %1861 = vmatpush.xpose.msra.mxu0 0.0
        %1862 = vmatpush.xpose.msra.mxu0 0.0
        %1863 = vmatpush.xpose.msra.mxu0 0.0
        %1864 = vmatpush.xpose.msra.mxu0 0.0
        %1865 = vmatpush.xpose.msra.mxu0 0.0
        %1866 = vmatpush.xpose.msra.mxu0 0.0
        %1867 = vmatpush.xpose.msra.mxu0 0.0
        %1868 = vmatpush.xpose.msra.mxu0 0.0
        %1869 = vmatpush.xpose.msra.mxu0 %v1852
        %1870 = vmatmul.f32.gmra.mxu0 %v1849
        %v1871 = vpop.f32.mrf.mxu0
        %v1872 = vadd.f32 0.0, %v1871
        %1873 = vdwg.mxu0
        %v1874 = vld [vmem:[%s8 + $0x30] sm:$0xff]
        %v1876 = vsel %vm675, %v1872, 0
        %1878 = vmatpush.msra.mxu0 0.0
        %1879 = vmatpush.msra.mxu0 0.0
        %1880 = vmatpush.msra.mxu0 0.0
        %1881 = vmatpush.msra.mxu0 0.0
        %1882 = vmatpush.msra.mxu0 0.0
        %1883 = vmatpush.msra.mxu0 0.0
        %1884 = vmatpush.msra.mxu0 0.0
        %1885 = vmatpush.msra.mxu0 0.0
        %1886 = vmatpush.msra.mxu0 0.0
        %1887 = vmatpush.msra.mxu0 0.0
        %1888 = vmatpush.msra.mxu0 0.0
        %1889 = vmatpush.msra.mxu0 0.0
        %1890 = vmatpush.msra.mxu0 0.0
        %1891 = vmatpush.msra.mxu0 0.0
        %1892 = vmatpush.msra.mxu0 0.0
        %1893 = vmatpush.msra.mxu0 %v1874
        %1894 = vmatmul.f32.gmra.mxu0 %v1876
        %v1895 = vpop.f32.mrf.mxu0
        %v1896 = vadd.f32 0.0, %v1895
        %1897 = vdwg.mxu0
        %v1898 = vadd.f32 %v1724, %v1896
        %1899 = vrot.lane.b32.xlu0 %v404, 72
        %v1900 = vpop.permute.xlu0 %1899
        %1901 = vrot.lane.b32.xlu0 %v406, 72
        %v1902 = vpop.permute.xlu0 %1901
        %v1903 = vsel %vm675, %v1900, 0
        %v1905 = vsel %vm675, %v1902, 0
        %1907 = vmatpush.msra.mxu0 0.0
        %1908 = vmatpush.msra.mxu0 0.0
        %1909 = vmatpush.msra.mxu0 0.0
        %1910 = vmatpush.msra.mxu0 0.0
        %1911 = vmatpush.msra.mxu0 0.0
        %1912 = vmatpush.msra.mxu0 0.0
        %1913 = vmatpush.msra.mxu0 0.0
        %1914 = vmatpush.msra.mxu0 0.0
        %1915 = vmatpush.msra.mxu0 0.0
        %1916 = vmatpush.msra.mxu0 0.0
        %1917 = vmatpush.msra.mxu0 0.0
        %1918 = vmatpush.msra.mxu0 0.0
        %1919 = vmatpush.msra.mxu0 0.0
        %1920 = vmatpush.msra.mxu0 0.0
        %1921 = vmatpush.msra.mxu0 0.0
        %1922 = vmatpush.msra.mxu0 %v523
        %1923 = vmatmul.f32.gmra.mxu0 %v1903
        %v1924 = vpop.f32.mrf.mxu0
        %v1925 = vadd.f32 0.0, %v1924
        %1926 = vmatmul.f32.gmra.mxu0 %v1905
        %v1927 = vpop.f32.mrf.mxu0
        %v1928 = vadd.f32 0.0, %v1927
        %1929 = vdwg.mxu0
        %v1930 = vsel %vm706, %v1925, -1e+30
        %v1931 = vsel %vm706, %v1928, -1e+30
        %v1932 = vsel %vm709, %v1930, -inf
        %1933 = vmax.xlane.f32.xlu0 %v1932
        %v1934 = vpop.xlane.xlu0 %1933
        %v1935 = vsel %vm709, %v1931, -inf
        %1936 = vmax.xlane.f32.xlu0 %v1935
        %v1937 = vpop.xlane.xlu0 %1936
        %v1938 = vsub.f32 %v1930, %v1934
        %v1939 = vsub.f32 %v1931, %v1937
        %v1940 = vmul.f32 %v1938, 1.442695
        %v1941 = vpow.pop %v1940
        %v1942 = vmul.f32 %v1939, 1.442695
        %v1943 = vpow.pop %v1942
        %v1944 = vsel %vm709, %v1941, 0.0
        %1945 = vadd.xlane.f32.xlu0 %v1944
        %v1946 = vpop.xlane.xlu0 %1945
        %v1947 = vsel %vm709, %v1943, 0.0
        %1948 = vadd.xlane.f32.xlu0 %v1947
        %v1949 = vpop.xlane.xlu0 %1948
        %v1950 = vrcp.pop %v1946
        %v1951 = vrcp.pop %v1949
        %v1952 = vmul.f32 %v1941, %v1950
        %v1953 = vmul.f32 %v1943, %v1951
        %1954 = vmatpush.msra.mxu0 0.0
        %1955 = vmatpush.msra.mxu0 0.0
        %1956 = vmatpush.msra.mxu0 0.0
        %1957 = vmatpush.msra.mxu0 0.0
        %1958 = vmatpush.msra.mxu0 0.0
        %1959 = vmatpush.msra.mxu0 0.0
        %1960 = vmatpush.msra.mxu0 0.0
        %1961 = vmatpush.msra.mxu0 0.0
        %1962 = vmatpush.msra.mxu0 0.0
        %1963 = vmatpush.msra.mxu0 0.0
        %1964 = vmatpush.msra.mxu0 0.0
        %1965 = vmatpush.msra.mxu0 0.0
        %1966 = vmatpush.msra.mxu0 0.0
        %1967 = vmatpush.msra.mxu0 0.0
        %1968 = vmatpush.msra.mxu0 %v1953
        %1969 = vmatpush.msra.mxu0 %v1952
        %1970 = vmatmul.f32.gmra.mxu0 %v733
        %v1971 = vpop.f32.mrf.mxu0
        %v1972 = vadd.f32 0.0, %v1971
        %1973 = vdwg.mxu0
        %v1974 = vsel %vm756, %v1925, -1e+30
        %v1975 = vsel %vm756, %v1928, -1e+30
        %v1976 = vsel %vm709, %v1974, -inf
        %1977 = vmax.xlane.f32.xlu0 %v1976
        %v1978 = vpop.xlane.xlu0 %1977
        %v1979 = vsel %vm709, %v1975, -inf
        %1980 = vmax.xlane.f32.xlu0 %v1979
        %v1981 = vpop.xlane.xlu0 %1980
        %v1982 = vsub.f32 %v1974, %v1978
        %v1983 = vsub.f32 %v1975, %v1981
        %v1984 = vmul.f32 %v1982, 1.442695
        %v1985 = vpow.pop %v1984
        %v1986 = vmul.f32 %v1983, 1.442695
        %v1987 = vpow.pop %v1986
        %v1988 = vsel %vm709, %v1985, 0.0
        %1989 = vadd.xlane.f32.xlu0 %v1988
        %v1990 = vpop.xlane.xlu0 %1989
        %v1991 = vsel %vm709, %v1987, 0.0
        %1992 = vadd.xlane.f32.xlu0 %v1991
        %v1993 = vpop.xlane.xlu0 %1992
        %v1994 = vrcp.pop %v1990
        %v1995 = vrcp.pop %v1993
        %v1996 = vmul.f32 %v1985, %v1994
        %v1997 = vmul.f32 %v1987, %v1995
        %1998 = vmatpush.msra.mxu0 0.0
        %1999 = vmatpush.msra.mxu0 0.0
        %2000 = vmatpush.msra.mxu0 0.0
        %2001 = vmatpush.msra.mxu0 0.0
        %2002 = vmatpush.msra.mxu0 0.0
        %2003 = vmatpush.msra.mxu0 0.0
        %2004 = vmatpush.msra.mxu0 0.0
        %2005 = vmatpush.msra.mxu0 0.0
        %2006 = vmatpush.msra.mxu0 0.0
        %2007 = vmatpush.msra.mxu0 0.0
        %2008 = vmatpush.msra.mxu0 0.0
        %2009 = vmatpush.msra.mxu0 0.0
        %2010 = vmatpush.msra.mxu0 0.0
        %2011 = vmatpush.msra.mxu0 0.0
        %2012 = vmatpush.msra.mxu0 %v1997
        %2013 = vmatpush.msra.mxu0 %v1996
        %2014 = vmatmul.f32.gmra.mxu0 %v733
        %v2015 = vpop.f32.mrf.mxu0
        %v2016 = vadd.f32 0.0, %v2015
        %2017 = vdwg.mxu0
        %v2019 = vrot.slane %v2016, 7
        %v2021 = vsel %vm804, %v1972, %v2019
        %v2023 = vsel %vm709, %v2021, 0
        %v2026 = vsel %vm709, %v640, 0
        %2028 = vmatpush.xpose.msra.mxu0 0.0
        %2029 = vmatpush.xpose.msra.mxu0 0.0
        %2030 = vmatpush.xpose.msra.mxu0 0.0
        %2031 = vmatpush.xpose.msra.mxu0 0.0
        %2032 = vmatpush.xpose.msra.mxu0 0.0
        %2033 = vmatpush.xpose.msra.mxu0 0.0
        %2034 = vmatpush.xpose.msra.mxu0 0.0
        %2035 = vmatpush.xpose.msra.mxu0 0.0
        %2036 = vmatpush.xpose.msra.mxu0 0.0
        %2037 = vmatpush.xpose.msra.mxu0 0.0
        %2038 = vmatpush.xpose.msra.mxu0 0.0
        %2039 = vmatpush.xpose.msra.mxu0 0.0
        %2040 = vmatpush.xpose.msra.mxu0 0.0
        %2041 = vmatpush.xpose.msra.mxu0 0.0
        %2042 = vmatpush.xpose.msra.mxu0 0.0
        %2043 = vmatpush.xpose.msra.mxu0 %v2026
        %2044 = vmatmul.f32.gmra.mxu0 %v2023
        %v2045 = vpop.f32.mrf.mxu0
        %v2046 = vadd.f32 0.0, %v2045
        %2047 = vdwg.mxu0
        %v2048 = vld [vmem:[%s8 + $0x38] sm:$0xff]
        %v2050 = vsel %vm675, %v2046, 0
        %2052 = vmatpush.msra.mxu0 0.0
        %2053 = vmatpush.msra.mxu0 0.0
        %2054 = vmatpush.msra.mxu0 0.0
        %2055 = vmatpush.msra.mxu0 0.0
        %2056 = vmatpush.msra.mxu0 0.0
        %2057 = vmatpush.msra.mxu0 0.0
        %2058 = vmatpush.msra.mxu0 0.0
        %2059 = vmatpush.msra.mxu0 0.0
        %2060 = vmatpush.msra.mxu0 0.0
        %2061 = vmatpush.msra.mxu0 0.0
        %2062 = vmatpush.msra.mxu0 0.0
        %2063 = vmatpush.msra.mxu0 0.0
        %2064 = vmatpush.msra.mxu0 0.0
        %2065 = vmatpush.msra.mxu0 0.0
        %2066 = vmatpush.msra.mxu0 0.0
        %2067 = vmatpush.msra.mxu0 %v2048
        %2068 = vmatmul.f32.gmra.mxu0 %v2050
        %v2069 = vpop.f32.mrf.mxu0
        %v2070 = vadd.f32 0.0, %v2069
        %2071 = vdwg.mxu0
        %v2072 = vadd.f32 %v1898, %v2070
        %v2073 = vld [vmem:[%s9] sm:$0x1]
        %v2075 = vperm.slane %v2073, 0
        %v2077 = vadd.f32 %v2072, %v2075
        %vm2078 = vcmask 25600
        %2079 = vst.msk [vmem:[%s334] sm:$0x3] %vm2078, %v2077
        %s2080 = sand.u32 %s234, 1
        %s2081 = scalar_lea.sflag [#allocation5], %s2080
        %s2082 = sand.u32 %s234, 1
        %s2083 = smul.addr %s2082, 2
        %s2084 = scalar_lea.vmem [#allocation4], %s2083
        // Predicated region
        $region57: #{tpu_custom_call.1} parent=55 // pred_check
          %p2085 = pneg %p244
        $region58: #{tpu_custom_call.1} parent=55 // pred_check_branch
          %2087 = sbr.rel (%p2085) target = $region60
        $region59: #{tpu_custom_call.1} parent=55 // pred_region
          %2089 = vsyncadd %s2081, 0
          %s2090 = smul.addr %s32, 2
          %s2091 = scalar_lea.hbm %s10, %s2090
          %s2093 = sshll.u32 %s2084, 4
          %s2094 = int_to_ptr.vmem [resolvable:$true] %s2093
          %s2095 = sshll.u32 %s2091, 4
          %s2096 = int_to_ptr.hbm [resolvable:$true] %s2095
          %2098 = dma.vmem_to_hbm [thread:$0]  %s2094, 32, %s2096, %s2081
        $region60: #{tpu_custom_call.1} parent=55 // pred_fallthru
          _
      $region56: #{tpu_custom_call.1} parent=5 // pred_fallthru
        _
      %p2099 = scmp.le.s32.totalorder 2, %s27
      // Predicated region
      $region61: #{tpu_custom_call.1} parent=5 // pred_check
        %p2100 = pneg %p2099
      $region62: #{tpu_custom_call.1} parent=5 // pred_check_branch
        %2102 = sbr.rel (%p2100) target = $region64
      $region63: #{tpu_custom_call.1} parent=5 // pred_region
        %s2103 = ssub.s32 %s27, 2
        // Predicated region
        $region65: #{tpu_custom_call.1} parent=63 // pred_check
          %p2104 = pneg %p250
        $region66: #{tpu_custom_call.1} parent=63 // pred_check_branch
          %2106 = sbr.rel (%p2104) target = $region68
        $region67: #{tpu_custom_call.1} parent=63 // pred_region
          %s2107 = sand.u32 %s235, 1
          %s2108 = scalar_lea.sflag [#allocation5], %s2107
          %s2109 = sand.u32 %s235, 1
          %s2110 = smul.addr %s2109, 2
          %s2111 = scalar_lea.vmem [#allocation4], %s2110
          %2113 = dma.done %s2108, 32
        $region68: #{tpu_custom_call.1} parent=63 // pred_fallthru
          _
      $region64: #{tpu_custom_call.1} parent=5 // pred_fallthru
        _
    $region6: #{tpu_custom_call.1} parent=1 // loop_footer
      %s31 = sadd.s32 1, %s27
    $region7: #{tpu_custom_call.1} parent=1 // loop_footer_branch
      %26 = sbr.rel target = $region3
    $region8: #{tpu_custom_call.1} parent=1 // loop_exit
      _
    %2114 = vsyncpa [#allocation5], 1
    %s2115 = scalar_lea.sflag [#allocation5], 1
    %2116 = vsyncpa %s2115, 1

</llo_original>
